<compile_context>
chip_gen: v7x
topology: tpu7x:2x2x1
jax: 0.10.0
libtpu: 0.0.40
codegen_flags: <defaults>
</compile_context>

<pallas_src>
import jax
import jax.numpy as jnp
from jax.experimental import pallas as pl
from jax.experimental.pallas import tpu as pltpu


def _round_up(n, m):
    return ((n + m - 1) // m) * m


def _pad2(x, rows, cols):
    return jnp.pad(x, ((0, rows - x.shape[0]), (0, cols - x.shape[1])))


# ----------------------------------------------------------------------------
# Fused Pallas kernel:
#   CLS embedding gather (DMA from HBM, ids in SMEM)
#   -> BERT pooler (dense + tanh)
#   -> fc1 + ReLU   (dropout = identity in eval)
#   -> mlp (final linear)
# Weights arrive pre-padded in bf16; accumulation and bias/activation math
# stay f32 via preferred_element_type.
# ----------------------------------------------------------------------------
def head_kernel(ids_ref, tt_ref,                         # SMEM: CLS / type ids
                wemb_ref, temb_ref,                      # HBM: embedding tables
                wp_ref, bp_ref, w1_ref, b1_ref, w2_ref, b2_ref,  # VMEM weights
                out_ref,                                 # VMEM output
                wbuf, tbuf, sems):                       # scratch
    Bp = out_ref.shape[0]

    def word_cp(b):
        return pltpu.make_async_copy(
            wemb_ref.at[pl.ds(ids_ref[b], 1), :],
            wbuf.at[pl.ds(b, 1), :], sems.at[0, b])

    def type_cp(b):
        return pltpu.make_async_copy(
            temb_ref.at[pl.ds(tt_ref[b], 1), :],
            tbuf.at[pl.ds(b, 1), :], sems.at[1, b])

    # Issue every row-gather DMA up front, then wait; Bp is small (<=8-ish)
    # at "unbatch" sizes so the static unroll is cheap.
    for b in range(Bp):
        word_cp(b).start()
        type_cp(b).start()
    for b in range(Bp):
        word_cp(b).wait()
        type_cp(b).wait()

    # BERT-style embedding sum (word + token-type) for the CLS position.
    x = (wbuf[...] + tbuf[...]).astype(jnp.bfloat16)

    # BERT pooler: tanh(cls @ Wp + bp)
    pooled = jnp.tanh(
        jnp.dot(x, wp_ref[...], preferred_element_type=jnp.float32)
        + bp_ref[...])
    # fc1 + ReLU
    h = jnp.maximum(
        jnp.dot(pooled.astype(jnp.bfloat16), w1_ref[...],
                preferred_element_type=jnp.float32) + b1_ref[...], 0.0)
    # Dropout (`bert_drop`) is identity in eval mode -> no-op.
    # mlp (final linear, no activation)
    out_ref[...] = (jnp.dot(h.astype(jnp.bfloat16), w2_ref[...],
                            preferred_element_type=jnp.float32)
                    + b2_ref[...]).astype(out_ref.dtype)


def _vmem_budget_bytes():
    # Generation-aware cap: never request full physical VMEM (64 MiB on v7x,
    # 128 MiB on v5e/v6e); leave ~30% headroom for Mosaic internal scratch.
    try:
        cap = int(pltpu.get_tpu_info().vmem_capacity_bytes)
    except Exception:
        cap = 64 << 20                      # conservative (v7x physical size)
    return int(0.7 * cap)


def bert_classifier_head(cls_ids, tt_ids, params):
    """cls_ids/tt_ids: [B] int32 -> logits [B, ntargets] float32."""
    B = cls_ids.shape[0]
    T = params["w2"].shape[1]
    Dp = params["wp_p"].shape[0]
    Hp = params["w1_p"].shape[1]
    Tp = params["w2_p"].shape[1]
    Bp = _round_up(max(B, 8), 8)            # sublane-aligned batch

    # Pad ids with 0 (a valid row); padded batch rows are sliced off below.
    ids_p = jnp.pad(cls_ids.astype(jnp.int32), (0, Bp - B))
    tts_p = jnp.pad(tt_ids.astype(jnp.int32), (0, Bp - B))

    wemb, temb = params["word_emb_p"], params["type_emb_p"]
    wp_p, bp_p = params["wp_p"], params["bp_p"]
    w1_p, b1_p = params["w1_p"], params["b1_p"]
    w2_p, b2_p = params["w2_p"], params["b2_p"]

    # VMEM footprint: bf16 weights + f32 biases + gather buffers +
    # f32 intermediates + output (embedding tables stay in HBM).
    weight_bytes = (2 * (wp_p.size + w1_p.size + w2_p.size)
                    + 4 * (bp_p.size + b1_p.size + b2_p.size))
    act_bytes = Bp * (2 * Dp + Dp + Hp + Tp) * 4
    footprint = weight_bytes + act_bytes
    vmem_limit = int(min(max(2 * footprint + (2 << 20), 4 << 20),
                         _vmem_budget_bytes()))
    # TODO(synk): if whole-array weight residency ever exceeds the per-gen
    # budget (large hidden_size on v7x's 64 MiB), switch to an H-tiled grid.

    cost = pl.CostEstimate(
        flops=2 * Bp * (Dp * Dp + Dp * Hp + Hp * Tp),
        transcendentals=Bp * Dp,
        bytes_accessed=weight_bytes + act_bytes + 2 * Bp * 4)

    smem = pl.BlockSpec(memory_space=pltpu.MemorySpace.SMEM)
    vmem = pl.BlockSpec(memory_space=pltpu.MemorySpace.VMEM)
    hbm = pl.BlockSpec(memory_space=pl.ANY)

    out_p = pl.pallas_call(
        head_kernel,
        out_shape=jax.ShapeDtypeStruct((Bp, Tp), jnp.float32),
        in_specs=[smem, smem, hbm, hbm,
                  vmem, vmem, vmem, vmem, vmem, vmem],
        out_specs=vmem,
        scratch_shapes=[pltpu.VMEM((Bp, Dp), jnp.float32),   # word-emb gather
                        pltpu.VMEM((Bp, Dp), jnp.float32),   # type-emb gather
                        pltpu.SemaphoreType.DMA((2, Bp))],
        compiler_params=pltpu.CompilerParams(vmem_limit_bytes=vmem_limit),
        cost_estimate=cost,
    )(ids_p, tts_p, wemb, temb, wp_p, bp_p, w1_p, b1_p, w2_p, b2_p)
    # NOTE: for batched serving (B >~ 64) add grid=(Bp // TM,) with
    # dimension_semantics=("parallel",) and weight index_maps returning (0,0)
    # so v7x's second TensorCore participates (TM=256 on v6e/v7x, 128 on v5e);
    # at "unbatch" sizes a grid only adds ~0.35 us/step overhead.
    return out_p[:B, :T]


# ----------------------------------------------------------------------------
# Glue: deterministic "BERT" embedding + full forward
# ----------------------------------------------------------------------------
def init_params(key, vocab_size, type_vocab_size, input_size, hidden_size,
                ntargets):
    ks = jax.random.split(key, 5)
    scale = 0.02
    word_emb = scale * jax.random.normal(ks[0], (vocab_size, input_size),
                                         jnp.float32)
    type_emb = scale * jax.random.normal(ks[1], (type_vocab_size, input_size),
                                         jnp.float32)
    wp = scale * jax.random.normal(ks[2], (input_size, input_size), jnp.float32)
    bp = jnp.zeros((1, input_size), jnp.float32)
    w1 = scale * jax.random.normal(ks[3], (input_size, hidden_size),
                                   jnp.float32)
    b1 = 0.01 * jnp.ones((1, hidden_size), jnp.float32)
    w2 = scale * jax.random.normal(ks[4], (hidden_size, ntargets), jnp.float32)
    b2 = jnp.zeros((1, ntargets), jnp.float32)

    # Hoisted (per perf review): pad to (8,128)-aligned tiles and cast weights
    # to bf16 ONCE here, so the per-call path never re-pads / re-casts.
    Dp = _round_up(max(input_size, 128), 128)
    Hp = _round_up(max(hidden_size, 128), 128)
    Tp = _round_up(max(ntargets, 128), 128)

    return {
        # raw f32 copies (reference checks / export)
        "word_emb": word_emb, "type_emb": type_emb,
        "wp": wp, "bp": bp, "w1": w1, "b1": b1, "w2": w2, "b2": b2,
        # padded copies consumed by the Pallas head kernel
        "word_emb_p": _pad2(word_emb, vocab_size, Dp),
        "type_emb_p": _pad2(type_emb, type_vocab_size, Dp),
        "wp_p": _pad2(wp, Dp, Dp).astype(jnp.bfloat16),
        "bp_p": _pad2(bp, 1, Dp),
        "w1_p": _pad2(w1, Dp, Hp).astype(jnp.bfloat16),
        "b1_p": _pad2(b1, 1, Hp),
        "w2_p": _pad2(w2, Hp, Tp).astype(jnp.bfloat16),
        "b2_p": _pad2(b2, 1, Tp),
    }


def _forward(params, ids, mask, token_type_ids):
    # Only the CLS (position 0) token feeds the pooler/head; its embedding
    # gather happens inside the Pallas kernel (ids go to SMEM).
    # TODO(synk): pretrained mBERT encoder (attention over `mask`) needs a
    # checkpoint and is not reproduced in-script; `mask` is unused here.
    del mask
    cls_ids = ids[:, 0].astype(jnp.int32)
    if token_type_ids is not None:
        tt_ids = token_type_ids[:, 0].astype(jnp.int32)
    else:
        # HF BERT defaults token_type_ids to zeros -> type-embedding row 0.
        tt_ids = jnp.zeros_like(cls_ids)
    return bert_classifier_head(cls_ids, tt_ids, params)


forward = jax.jit(_forward)


if __name__ == "__main__":
    # Small, BERT-consistent shapes.
    B, S = 2, 8                 # batch, sequence length
    vocab_size = 64
    type_vocab_size = 2
    input_size = 32             # params['input_size']  (BERT hidden dim)
    hidden_size = 32            # params['hidden_size']
    ntargets = 8                # params['ntargets']

    key = jax.random.PRNGKey(0)
    kp, kid, ktt = jax.random.split(key, 3)

    params = init_params(kp, vocab_size, type_vocab_size, input_size,
                         hidden_size, ntargets)

    ids = jax.random.randint(kid, (B, S), 0, vocab_size, dtype=jnp.int32)
    mask = jnp.ones((B, S), dtype=jnp.int32)
    token_type_ids = jax.random.randint(ktt, (B, S), 0, type_vocab_size,
                                        dtype=jnp.int32)

    logits = forward(params, ids, mask, token_type_ids)
    jax.block_until_ready(logits)
    assert logits.shape == (B, ntargets)
    assert bool(jnp.all(jnp.isfinite(logits)))

    # Pure-JAX reference of the kernel math (bf16 weights / f32 accumulation;
    # zero padding is inert so unpadded shapes give the same result).
    cls_hidden = (jnp.take(params["word_emb"], ids[:, 0], axis=0)
                  + jnp.take(params["type_emb"], token_type_ids[:, 0], axis=0))
    pooled = jnp.tanh(
        jnp.dot(cls_hidden.astype(jnp.bfloat16),
                params["wp"].astype(jnp.bfloat16),
                preferred_element_type=jnp.float32) + params["bp"])
    h_ref = jnp.maximum(
        jnp.dot(pooled.astype(jnp.bfloat16),
                params["w1"].astype(jnp.bfloat16),
                preferred_element_type=jnp.float32) + params["b1"], 0.0)
    ref = jnp.dot(h_ref.astype(jnp.bfloat16),
                  params["w2"].astype(jnp.bfloat16),
                  preferred_element_type=jnp.float32) + params["b2"]
    assert jnp.allclose(logits, ref, atol=1e-4, rtol=1e-2)

    # Loose sanity check against the full-f32 reference (bf16 weights only
    # introduce ~1e-2-level relative deviation).
    pooled_f32 = jnp.tanh(cls_hidden @ params["wp"] + params["bp"])
    ref_f32 = (jnp.maximum(pooled_f32 @ params["w1"] + params["b1"], 0.0)
               @ params["w2"] + params["b2"])
    assert jnp.allclose(logits, ref_f32, atol=5e-2, rtol=5e-2)

    print("KERNEL_OK")
</pallas_src>

<mosaic_0001>
module attributes {stable_mosaic.version = 11 : i64} {
  func.func @head_kernel(%arg0: memref<8xi32, #tpu.memory_space<smem>>, %arg1: memref<8xi32, #tpu.memory_space<smem>>, %arg2: memref<64x128xf32, #tpu.memory_space<any>>, %arg3: memref<2x128xf32, #tpu.memory_space<any>>, %arg4: memref<128x128xbf16, #tpu.memory_space<vmem>>, %arg5: memref<1x128xf32, #tpu.memory_space<vmem>>, %arg6: memref<128x128xbf16, #tpu.memory_space<vmem>>, %arg7: memref<1x128xf32, #tpu.memory_space<vmem>>, %arg8: memref<128x128xbf16, #tpu.memory_space<vmem>>, %arg9: memref<1x128xf32, #tpu.memory_space<vmem>>, %arg10: memref<8x128xf32, #tpu.memory_space<vmem>>, %arg11: memref<8x128xf32, #tpu.memory_space<vmem>>, %arg12: memref<8x128xf32, #tpu.memory_space<vmem>>, %arg13: memref<2x8x!tpu.dma_semaphore, #tpu.memory_space<semaphore_mem>>) attributes {dimension_semantics = [], scalar_prefetch = 0 : i64, scratch_operands = 3 : i64, tpu.core_type = #tpu.core_type<tc>} {
    %c0 = arith.constant 0 : index
    %0 = memref.load %arg0[%c0] : memref<8xi32, #tpu.memory_space<smem>>
    %c0_i32 = arith.constant 0 : i32
    %c0_i32_0 = arith.constant 0 : i32
    %c0_i32_1 = arith.constant 0 : i32
    %1 = tpu.memref_slice %arg2[%0, %c0_i32_1] : memref<64x128xf32, #tpu.memory_space<any>> -> memref<1x128xf32, #tpu.memory_space<any>>
    %c0_i32_2 = arith.constant 0 : i32
    %c0_i32_3 = arith.constant 0 : i32
    %2 = tpu.memref_slice %arg11[%c0_i32_2, %c0_i32_3] : memref<8x128xf32, #tpu.memory_space<vmem>> -> memref<1x128xf32, #tpu.memory_space<vmem>>
    %3 = tpu.memref_slice %arg13[%c0_i32, %c0_i32_0] : memref<2x8x!tpu.dma_semaphore, #tpu.memory_space<semaphore_mem>> -> memref<1x1x!tpu.dma_semaphore, #tpu.memory_space<semaphore_mem>>
    %4 = tpu.memref_squeeze %3 : memref<1x1x!tpu.dma_semaphore, #tpu.memory_space<semaphore_mem>> -> memref<!tpu.dma_semaphore, #tpu.memory_space<semaphore_mem>>
    tpu.enqueue_dma source(%1 : memref<1x128xf32, #tpu.memory_space<any>>) target(%2 : memref<1x128xf32, #tpu.memory_space<vmem>>) target_semaphore(%4 : memref<!tpu.dma_semaphore, #tpu.memory_space<semaphore_mem>>)
    %c0_4 = arith.constant 0 : index
    %5 = memref.load %arg1[%c0_4] : memref<8xi32, #tpu.memory_space<smem>>
    %c1_i32 = arith.constant 1 : i32
    %c0_i32_5 = arith.constant 0 : i32
    %c0_i32_6 = arith.constant 0 : i32
    %6 = tpu.memref_slice %arg3[%5, %c0_i32_6] : memref<2x128xf32, #tpu.memory_space<any>> -> memref<1x128xf32, #tpu.memory_space<any>>
    %c0_i32_7 = arith.constant 0 : i32
    %c0_i32_8 = arith.constant 0 : i32
    %7 = tpu.memref_slice %arg12[%c0_i32_7, %c0_i32_8] : memref<8x128xf32, #tpu.memory_space<vmem>> -> memref<1x128xf32, #tpu.memory_space<vmem>>
    %8 = tpu.memref_slice %arg13[%c1_i32, %c0_i32_5] : memref<2x8x!tpu.dma_semaphore, #tpu.memory_space<semaphore_mem>> -> memref<1x1x!tpu.dma_semaphore, #tpu.memory_space<semaphore_mem>>
    %9 = tpu.memref_squeeze %8 : memref<1x1x!tpu.dma_semaphore, #tpu.memory_space<semaphore_mem>> -> memref<!tpu.dma_semaphore, #tpu.memory_space<semaphore_mem>>
    tpu.enqueue_dma source(%6 : memref<1x128xf32, #tpu.memory_space<any>>) target(%7 : memref<1x128xf32, #tpu.memory_space<vmem>>) target_semaphore(%9 : memref<!tpu.dma_semaphore, #tpu.memory_space<semaphore_mem>>)
    %c1 = arith.constant 1 : index
    %10 = memref.load %arg0[%c1] : memref<8xi32, #tpu.memory_space<smem>>
    %c0_i32_9 = arith.constant 0 : i32
    %c1_i32_10 = arith.constant 1 : i32
    %c0_i32_11 = arith.constant 0 : i32
    %11 = tpu.memref_slice %arg2[%10, %c0_i32_11] : memref<64x128xf32, #tpu.memory_space<any>> -> memref<1x128xf32, #tpu.memory_space<any>>
    %c1_i32_12 = arith.constant 1 : i32
    %c0_i32_13 = arith.constant 0 : i32
    %12 = tpu.memref_slice %arg11[%c1_i32_12, %c0_i32_13] : memref<8x128xf32, #tpu.memory_space<vmem>> -> memref<1x128xf32, #tpu.memory_space<vmem>>
    %13 = tpu.memref_slice %arg13[%c0_i32_9, %c1_i32_10] : memref<2x8x!tpu.dma_semaphore, #tpu.memory_space<semaphore_mem>> -> memref<1x1x!tpu.dma_semaphore, #tpu.memory_space<semaphore_mem>>
    %14 = tpu.memref_squeeze %13 : memref<1x1x!tpu.dma_semaphore, #tpu.memory_space<semaphore_mem>> -> memref<!tpu.dma_semaphore, #tpu.memory_space<semaphore_mem>>
    tpu.enqueue_dma source(%11 : memref<1x128xf32, #tpu.memory_space<any>>) target(%12 : memref<1x128xf32, #tpu.memory_space<vmem>>) target_semaphore(%14 : memref<!tpu.dma_semaphore, #tpu.memory_space<semaphore_mem>>)
    %c1_14 = arith.constant 1 : index
    %15 = memref.load %arg1[%c1_14] : memref<8xi32, #tpu.memory_space<smem>>
    %c1_i32_15 = arith.constant 1 : i32
    %c1_i32_16 = arith.constant 1 : i32
    %c0_i32_17 = arith.constant 0 : i32
    %16 = tpu.memref_slice %arg3[%15, %c0_i32_17] : memref<2x128xf32, #tpu.memory_space<any>> -> memref<1x128xf32, #tpu.memory_space<any>>
    %c1_i32_18 = arith.constant 1 : i32
    %c0_i32_19 = arith.constant 0 : i32
    %17 = tpu.memref_slice %arg12[%c1_i32_18, %c0_i32_19] : memref<8x128xf32, #tpu.memory_space<vmem>> -> memref<1x128xf32, #tpu.memory_space<vmem>>
    %18 = tpu.memref_slice %arg13[%c1_i32_15, %c1_i32_16] : memref<2x8x!tpu.dma_semaphore, #tpu.memory_space<semaphore_mem>> -> memref<1x1x!tpu.dma_semaphore, #tpu.memory_space<semaphore_mem>>
    %19 = tpu.memref_squeeze %18 : memref<1x1x!tpu.dma_semaphore, #tpu.memory_space<semaphore_mem>> -> memref<!tpu.dma_semaphore, #tpu.memory_space<semaphore_mem>>
    tpu.enqueue_dma source(%16 : memref<1x128xf32, #tpu.memory_space<any>>) target(%17 : memref<1x128xf32, #tpu.memory_space<vmem>>) target_semaphore(%19 : memref<!tpu.dma_semaphore, #tpu.memory_space<semaphore_mem>>)
    %c2 = arith.constant 2 : index
    %20 = memref.load %arg0[%c2] : memref<8xi32, #tpu.memory_space<smem>>
    %c0_i32_20 = arith.constant 0 : i32
    %c2_i32 = arith.constant 2 : i32
    %c0_i32_21 = arith.constant 0 : i32
    %21 = tpu.memref_slice %arg2[%20, %c0_i32_21] : memref<64x128xf32, #tpu.memory_space<any>> -> memref<1x128xf32, #tpu.memory_space<any>>
    %c2_i32_22 = arith.constant 2 : i32
    %c0_i32_23 = arith.constant 0 : i32
    %22 = tpu.memref_slice %arg11[%c2_i32_22, %c0_i32_23] : memref<8x128xf32, #tpu.memory_space<vmem>> -> memref<1x128xf32, #tpu.memory_space<vmem>>
    %23 = tpu.memref_slice %arg13[%c0_i32_20, %c2_i32] : memref<2x8x!tpu.dma_semaphore, #tpu.memory_space<semaphore_mem>> -> memref<1x1x!tpu.dma_semaphore, #tpu.memory_space<semaphore_mem>>
    %24 = tpu.memref_squeeze %23 : memref<1x1x!tpu.dma_semaphore, #tpu.memory_space<semaphore_mem>> -> memref<!tpu.dma_semaphore, #tpu.memory_space<semaphore_mem>>
    tpu.enqueue_dma source(%21 : memref<1x128xf32, #tpu.memory_space<any>>) target(%22 : memref<1x128xf32, #tpu.memory_space<vmem>>) target_semaphore(%24 : memref<!tpu.dma_semaphore, #tpu.memory_space<semaphore_mem>>)
    %c2_24 = arith.constant 2 : index
    %25 = memref.load %arg1[%c2_24] : memref<8xi32, #tpu.memory_space<smem>>
    %c1_i32_25 = arith.constant 1 : i32
    %c2_i32_26 = arith.constant 2 : i32
    %c0_i32_27 = arith.constant 0 : i32
    %26 = tpu.memref_slice %arg3[%25, %c0_i32_27] : memref<2x128xf32, #tpu.memory_space<any>> -> memref<1x128xf32, #tpu.memory_space<any>>
    %c2_i32_28 = arith.constant 2 : i32
    %c0_i32_29 = arith.constant 0 : i32
    %27 = tpu.memref_slice %arg12[%c2_i32_28, %c0_i32_29] : memref<8x128xf32, #tpu.memory_space<vmem>> -> memref<1x128xf32, #tpu.memory_space<vmem>>
    %28 = tpu.memref_slice %arg13[%c1_i32_25, %c2_i32_26] : memref<2x8x!tpu.dma_semaphore, #tpu.memory_space<semaphore_mem>> -> memref<1x1x!tpu.dma_semaphore, #tpu.memory_space<semaphore_mem>>
    %29 = tpu.memref_squeeze %28 : memref<1x1x!tpu.dma_semaphore, #tpu.memory_space<semaphore_mem>> -> memref<!tpu.dma_semaphore, #tpu.memory_space<semaphore_mem>>
    tpu.enqueue_dma source(%26 : memref<1x128xf32, #tpu.memory_space<any>>) target(%27 : memref<1x128xf32, #tpu.memory_space<vmem>>) target_semaphore(%29 : memref<!tpu.dma_semaphore, #tpu.memory_space<semaphore_mem>>)
    %c3 = arith.constant 3 : index
    %30 = memref.load %arg0[%c3] : memref<8xi32, #tpu.memory_space<smem>>
    %c0_i32_30 = arith.constant 0 : i32
    %c3_i32 = arith.constant 3 : i32
    %c0_i32_31 = arith.constant 0 : i32
    %31 = tpu.memref_slice %arg2[%30, %c0_i32_31] : memref<64x128xf32, #tpu.memory_space<any>> -> memref<1x128xf32, #tpu.memory_space<any>>
    %c3_i32_32 = arith.constant 3 : i32
    %c0_i32_33 = arith.constant 0 : i32
    %32 = tpu.memref_slice %arg11[%c3_i32_32, %c0_i32_33] : memref<8x128xf32, #tpu.memory_space<vmem>> -> memref<1x128xf32, #tpu.memory_space<vmem>>
    %33 = tpu.memref_slice %arg13[%c0_i32_30, %c3_i32] : memref<2x8x!tpu.dma_semaphore, #tpu.memory_space<semaphore_mem>> -> memref<1x1x!tpu.dma_semaphore, #tpu.memory_space<semaphore_mem>>
    %34 = tpu.memref_squeeze %33 : memref<1x1x!tpu.dma_semaphore, #tpu.memory_space<semaphore_mem>> -> memref<!tpu.dma_semaphore, #tpu.memory_space<semaphore_mem>>
    tpu.enqueue_dma source(%31 : memref<1x128xf32, #tpu.memory_space<any>>) target(%32 : memref<1x128xf32, #tpu.memory_space<vmem>>) target_semaphore(%34 : memref<!tpu.dma_semaphore, #tpu.memory_space<semaphore_mem>>)
    %c3_34 = arith.constant 3 : index
    %35 = memref.load %arg1[%c3_34] : memref<8xi32, #tpu.memory_space<smem>>
    %c1_i32_35 = arith.constant 1 : i32
    %c3_i32_36 = arith.constant 3 : i32
    %c0_i32_37 = arith.constant 0 : i32
    %36 = tpu.memref_slice %arg3[%35, %c0_i32_37] : memref<2x128xf32, #tpu.memory_space<any>> -> memref<1x128xf32, #tpu.memory_space<any>>
    %c3_i32_38 = arith.constant 3 : i32
    %c0_i32_39 = arith.constant 0 : i32
    %37 = tpu.memref_slice %arg12[%c3_i32_38, %c0_i32_39] : memref<8x128xf32, #tpu.memory_space<vmem>> -> memref<1x128xf32, #tpu.memory_space<vmem>>
    %38 = tpu.memref_slice %arg13[%c1_i32_35, %c3_i32_36] : memref<2x8x!tpu.dma_semaphore, #tpu.memory_space<semaphore_mem>> -> memref<1x1x!tpu.dma_semaphore, #tpu.memory_space<semaphore_mem>>
    %39 = tpu.memref_squeeze %38 : memref<1x1x!tpu.dma_semaphore, #tpu.memory_space<semaphore_mem>> -> memref<!tpu.dma_semaphore, #tpu.memory_space<semaphore_mem>>
    tpu.enqueue_dma source(%36 : memref<1x128xf32, #tpu.memory_space<any>>) target(%37 : memref<1x128xf32, #tpu.memory_space<vmem>>) target_semaphore(%39 : memref<!tpu.dma_semaphore, #tpu.memory_space<semaphore_mem>>)
    %c4 = arith.constant 4 : index
    %40 = memref.load %arg0[%c4] : memref<8xi32, #tpu.memory_space<smem>>
    %c0_i32_40 = arith.constant 0 : i32
    %c4_i32 = arith.constant 4 : i32
    %c0_i32_41 = arith.constant 0 : i32
    %41 = tpu.memref_slice %arg2[%40, %c0_i32_41] : memref<64x128xf32, #tpu.memory_space<any>> -> memref<1x128xf32, #tpu.memory_space<any>>
    %c4_i32_42 = arith.constant 4 : i32
    %c0_i32_43 = arith.constant 0 : i32
    %42 = tpu.memref_slice %arg11[%c4_i32_42, %c0_i32_43] : memref<8x128xf32, #tpu.memory_space<vmem>> -> memref<1x128xf32, #tpu.memory_space<vmem>>
    %43 = tpu.memref_slice %arg13[%c0_i32_40, %c4_i32] : memref<2x8x!tpu.dma_semaphore, #tpu.memory_space<semaphore_mem>> -> memref<1x1x!tpu.dma_semaphore, #tpu.memory_space<semaphore_mem>>
    %44 = tpu.memref_squeeze %43 : memref<1x1x!tpu.dma_semaphore, #tpu.memory_space<semaphore_mem>> -> memref<!tpu.dma_semaphore, #tpu.memory_space<semaphore_mem>>
    tpu.enqueue_dma source(%41 : memref<1x128xf32, #tpu.memory_space<any>>) target(%42 : memref<1x128xf32, #tpu.memory_space<vmem>>) target_semaphore(%44 : memref<!tpu.dma_semaphore, #tpu.memory_space<semaphore_mem>>)
    %c4_44 = arith.constant 4 : index
    %45 = memref.load %arg1[%c4_44] : memref<8xi32, #tpu.memory_space<smem>>
    %c1_i32_45 = arith.constant 1 : i32
    %c4_i32_46 = arith.constant 4 : i32
    %c0_i32_47 = arith.constant 0 : i32
    %46 = tpu.memref_slice %arg3[%45, %c0_i32_47] : memref<2x128xf32, #tpu.memory_space<any>> -> memref<1x128xf32, #tpu.memory_space<any>>
    %c4_i32_48 = arith.constant 4 : i32
    %c0_i32_49 = arith.constant 0 : i32
    %47 = tpu.memref_slice %arg12[%c4_i32_48, %c0_i32_49] : memref<8x128xf32, #tpu.memory_space<vmem>> -> memref<1x128xf32, #tpu.memory_space<vmem>>
    %48 = tpu.memref_slice %arg13[%c1_i32_45, %c4_i32_46] : memref<2x8x!tpu.dma_semaphore, #tpu.memory_space<semaphore_mem>> -> memref<1x1x!tpu.dma_semaphore, #tpu.memory_space<semaphore_mem>>
    %49 = tpu.memref_squeeze %48 : memref<1x1x!tpu.dma_semaphore, #tpu.memory_space<semaphore_mem>> -> memref<!tpu.dma_semaphore, #tpu.memory_space<semaphore_mem>>
    tpu.enqueue_dma source(%46 : memref<1x128xf32, #tpu.memory_space<any>>) target(%47 : memref<1x128xf32, #tpu.memory_space<vmem>>) target_semaphore(%49 : memref<!tpu.dma_semaphore, #tpu.memory_space<semaphore_mem>>)
    %c5 = arith.constant 5 : index
    %50 = memref.load %arg0[%c5] : memref<8xi32, #tpu.memory_space<smem>>
    %c0_i32_50 = arith.constant 0 : i32
    %c5_i32 = arith.constant 5 : i32
    %c0_i32_51 = arith.constant 0 : i32
    %51 = tpu.memref_slice %arg2[%50, %c0_i32_51] : memref<64x128xf32, #tpu.memory_space<any>> -> memref<1x128xf32, #tpu.memory_space<any>>
    %c5_i32_52 = arith.constant 5 : i32
    %c0_i32_53 = arith.constant 0 : i32
    %52 = tpu.memref_slice %arg11[%c5_i32_52, %c0_i32_53] : memref<8x128xf32, #tpu.memory_space<vmem>> -> memref<1x128xf32, #tpu.memory_space<vmem>>
    %53 = tpu.memref_slice %arg13[%c0_i32_50, %c5_i32] : memref<2x8x!tpu.dma_semaphore, #tpu.memory_space<semaphore_mem>> -> memref<1x1x!tpu.dma_semaphore, #tpu.memory_space<semaphore_mem>>
    %54 = tpu.memref_squeeze %53 : memref<1x1x!tpu.dma_semaphore, #tpu.memory_space<semaphore_mem>> -> memref<!tpu.dma_semaphore, #tpu.memory_space<semaphore_mem>>
    tpu.enqueue_dma source(%51 : memref<1x128xf32, #tpu.memory_space<any>>) target(%52 : memref<1x128xf32, #tpu.memory_space<vmem>>) target_semaphore(%54 : memref<!tpu.dma_semaphore, #tpu.memory_space<semaphore_mem>>)
    %c5_54 = arith.constant 5 : index
    %55 = memref.load %arg1[%c5_54] : memref<8xi32, #tpu.memory_space<smem>>
    %c1_i32_55 = arith.constant 1 : i32
    %c5_i32_56 = arith.constant 5 : i32
    %c0_i32_57 = arith.constant 0 : i32
    %56 = tpu.memref_slice %arg3[%55, %c0_i32_57] : memref<2x128xf32, #tpu.memory_space<any>> -> memref<1x128xf32, #tpu.memory_space<any>>
    %c5_i32_58 = arith.constant 5 : i32
    %c0_i32_59 = arith.constant 0 : i32
    %57 = tpu.memref_slice %arg12[%c5_i32_58, %c0_i32_59] : memref<8x128xf32, #tpu.memory_space<vmem>> -> memref<1x128xf32, #tpu.memory_space<vmem>>
    %58 = tpu.memref_slice %arg13[%c1_i32_55, %c5_i32_56] : memref<2x8x!tpu.dma_semaphore, #tpu.memory_space<semaphore_mem>> -> memref<1x1x!tpu.dma_semaphore, #tpu.memory_space<semaphore_mem>>
    %59 = tpu.memref_squeeze %58 : memref<1x1x!tpu.dma_semaphore, #tpu.memory_space<semaphore_mem>> -> memref<!tpu.dma_semaphore, #tpu.memory_space<semaphore_mem>>
    tpu.enqueue_dma source(%56 : memref<1x128xf32, #tpu.memory_space<any>>) target(%57 : memref<1x128xf32, #tpu.memory_space<vmem>>) target_semaphore(%59 : memref<!tpu.dma_semaphore, #tpu.memory_space<semaphore_mem>>)
    %c6 = arith.constant 6 : index
    %60 = memref.load %arg0[%c6] : memref<8xi32, #tpu.memory_space<smem>>
    %c0_i32_60 = arith.constant 0 : i32
    %c6_i32 = arith.constant 6 : i32
    %c0_i32_61 = arith.constant 0 : i32
    %61 = tpu.memref_slice %arg2[%60, %c0_i32_61] : memref<64x128xf32, #tpu.memory_space<any>> -> memref<1x128xf32, #tpu.memory_space<any>>
    %c6_i32_62 = arith.constant 6 : i32
    %c0_i32_63 = arith.constant 0 : i32
    %62 = tpu.memref_slice %arg11[%c6_i32_62, %c0_i32_63] : memref<8x128xf32, #tpu.memory_space<vmem>> -> memref<1x128xf32, #tpu.memory_space<vmem>>
    %63 = tpu.memref_slice %arg13[%c0_i32_60, %c6_i32] : memref<2x8x!tpu.dma_semaphore, #tpu.memory_space<semaphore_mem>> -> memref<1x1x!tpu.dma_semaphore, #tpu.memory_space<semaphore_mem>>
    %64 = tpu.memref_squeeze %63 : memref<1x1x!tpu.dma_semaphore, #tpu.memory_space<semaphore_mem>> -> memref<!tpu.dma_semaphore, #tpu.memory_space<semaphore_mem>>
    tpu.enqueue_dma source(%61 : memref<1x128xf32, #tpu.memory_space<any>>) target(%62 : memref<1x128xf32, #tpu.memory_space<vmem>>) target_semaphore(%64 : memref<!tpu.dma_semaphore, #tpu.memory_space<semaphore_mem>>)
    %c6_64 = arith.constant 6 : index
    %65 = memref.load %arg1[%c6_64] : memref<8xi32, #tpu.memory_space<smem>>
    %c1_i32_65 = arith.constant 1 : i32
    %c6_i32_66 = arith.constant 6 : i32
    %c0_i32_67 = arith.constant 0 : i32
    %66 = tpu.memref_slice %arg3[%65, %c0_i32_67] : memref<2x128xf32, #tpu.memory_space<any>> -> memref<1x128xf32, #tpu.memory_space<any>>
    %c6_i32_68 = arith.constant 6 : i32
    %c0_i32_69 = arith.constant 0 : i32
    %67 = tpu.memref_slice %arg12[%c6_i32_68, %c0_i32_69] : memref<8x128xf32, #tpu.memory_space<vmem>> -> memref<1x128xf32, #tpu.memory_space<vmem>>
    %68 = tpu.memref_slice %arg13[%c1_i32_65, %c6_i32_66] : memref<2x8x!tpu.dma_semaphore, #tpu.memory_space<semaphore_mem>> -> memref<1x1x!tpu.dma_semaphore, #tpu.memory_space<semaphore_mem>>
    %69 = tpu.memref_squeeze %68 : memref<1x1x!tpu.dma_semaphore, #tpu.memory_space<semaphore_mem>> -> memref<!tpu.dma_semaphore, #tpu.memory_space<semaphore_mem>>
    tpu.enqueue_dma source(%66 : memref<1x128xf32, #tpu.memory_space<any>>) target(%67 : memref<1x128xf32, #tpu.memory_space<vmem>>) target_semaphore(%69 : memref<!tpu.dma_semaphore, #tpu.memory_space<semaphore_mem>>)
    %c7 = arith.constant 7 : index
    %70 = memref.load %arg0[%c7] : memref<8xi32, #tpu.memory_space<smem>>
    %c0_i32_70 = arith.constant 0 : i32
    %c7_i32 = arith.constant 7 : i32
    %c0_i32_71 = arith.constant 0 : i32
    %71 = tpu.memref_slice %arg2[%70, %c0_i32_71] : memref<64x128xf32, #tpu.memory_space<any>> -> memref<1x128xf32, #tpu.memory_space<any>>
    %c7_i32_72 = arith.constant 7 : i32
    %c0_i32_73 = arith.constant 0 : i32
    %72 = tpu.memref_slice %arg11[%c7_i32_72, %c0_i32_73] : memref<8x128xf32, #tpu.memory_space<vmem>> -> memref<1x128xf32, #tpu.memory_space<vmem>>
    %73 = tpu.memref_slice %arg13[%c0_i32_70, %c7_i32] : memref<2x8x!tpu.dma_semaphore, #tpu.memory_space<semaphore_mem>> -> memref<1x1x!tpu.dma_semaphore, #tpu.memory_space<semaphore_mem>>
    %74 = tpu.memref_squeeze %73 : memref<1x1x!tpu.dma_semaphore, #tpu.memory_space<semaphore_mem>> -> memref<!tpu.dma_semaphore, #tpu.memory_space<semaphore_mem>>
    tpu.enqueue_dma source(%71 : memref<1x128xf32, #tpu.memory_space<any>>) target(%72 : memref<1x128xf32, #tpu.memory_space<vmem>>) target_semaphore(%74 : memref<!tpu.dma_semaphore, #tpu.memory_space<semaphore_mem>>)
    %c7_74 = arith.constant 7 : index
    %75 = memref.load %arg1[%c7_74] : memref<8xi32, #tpu.memory_space<smem>>
    %c1_i32_75 = arith.constant 1 : i32
    %c7_i32_76 = arith.constant 7 : i32
    %c0_i32_77 = arith.constant 0 : i32
    %76 = tpu.memref_slice %arg3[%75, %c0_i32_77] : memref<2x128xf32, #tpu.memory_space<any>> -> memref<1x128xf32, #tpu.memory_space<any>>
    %c7_i32_78 = arith.constant 7 : i32
    %c0_i32_79 = arith.constant 0 : i32
    %77 = tpu.memref_slice %arg12[%c7_i32_78, %c0_i32_79] : memref<8x128xf32, #tpu.memory_space<vmem>> -> memref<1x128xf32, #tpu.memory_space<vmem>>
    %78 = tpu.memref_slice %arg13[%c1_i32_75, %c7_i32_76] : memref<2x8x!tpu.dma_semaphore, #tpu.memory_space<semaphore_mem>> -> memref<1x1x!tpu.dma_semaphore, #tpu.memory_space<semaphore_mem>>
    %79 = tpu.memref_squeeze %78 : memref<1x1x!tpu.dma_semaphore, #tpu.memory_space<semaphore_mem>> -> memref<!tpu.dma_semaphore, #tpu.memory_space<semaphore_mem>>
    tpu.enqueue_dma source(%76 : memref<1x128xf32, #tpu.memory_space<any>>) target(%77 : memref<1x128xf32, #tpu.memory_space<vmem>>) target_semaphore(%79 : memref<!tpu.dma_semaphore, #tpu.memory_space<semaphore_mem>>)
    %c0_80 = arith.constant 0 : index
    %80 = memref.load %arg0[%c0_80] : memref<8xi32, #tpu.memory_space<smem>>
    %c0_i32_81 = arith.constant 0 : i32
    %c0_i32_82 = arith.constant 0 : i32
    %c0_i32_83 = arith.constant 0 : i32
    %81 = tpu.memref_slice %arg2[%80, %c0_i32_83] : memref<64x128xf32, #tpu.memory_space<any>> -> memref<1x128xf32, #tpu.memory_space<any>>
    %c0_i32_84 = arith.constant 0 : i32
    %c0_i32_85 = arith.constant 0 : i32
    %82 = tpu.memref_slice %arg11[%c0_i32_84, %c0_i32_85] : memref<8x128xf32, #tpu.memory_space<vmem>> -> memref<1x128xf32, #tpu.memory_space<vmem>>
    %83 = tpu.memref_slice %arg13[%c0_i32_81, %c0_i32_82] : memref<2x8x!tpu.dma_semaphore, #tpu.memory_space<semaphore_mem>> -> memref<1x1x!tpu.dma_semaphore, #tpu.memory_space<semaphore_mem>>
    %84 = tpu.memref_squeeze %83 : memref<1x1x!tpu.dma_semaphore, #tpu.memory_space<semaphore_mem>> -> memref<!tpu.dma_semaphore, #tpu.memory_space<semaphore_mem>>
    tpu.wait_dma2 semaphore(%84 : memref<!tpu.dma_semaphore, #tpu.memory_space<semaphore_mem>>) src(%81 : memref<1x128xf32, #tpu.memory_space<any>>) dst(%82 : memref<1x128xf32, #tpu.memory_space<vmem>>)
    %c0_86 = arith.constant 0 : index
    %85 = memref.load %arg1[%c0_86] : memref<8xi32, #tpu.memory_space<smem>>
    %c1_i32_87 = arith.constant 1 : i32
    %c0_i32_88 = arith.constant 0 : i32
    %c0_i32_89 = arith.constant 0 : i32
    %86 = tpu.memref_slice %arg3[%85, %c0_i32_89] : memref<2x128xf32, #tpu.memory_space<any>> -> memref<1x128xf32, #tpu.memory_space<any>>
    %c0_i32_90 = arith.constant 0 : i32
    %c0_i32_91 = arith.constant 0 : i32
    %87 = tpu.memref_slice %arg12[%c0_i32_90, %c0_i32_91] : memref<8x128xf32, #tpu.memory_space<vmem>> -> memref<1x128xf32, #tpu.memory_space<vmem>>
    %88 = tpu.memref_slice %arg13[%c1_i32_87, %c0_i32_88] : memref<2x8x!tpu.dma_semaphore, #tpu.memory_space<semaphore_mem>> -> memref<1x1x!tpu.dma_semaphore, #tpu.memory_space<semaphore_mem>>
    %89 = tpu.memref_squeeze %88 : memref<1x1x!tpu.dma_semaphore, #tpu.memory_space<semaphore_mem>> -> memref<!tpu.dma_semaphore, #tpu.memory_space<semaphore_mem>>
    tpu.wait_dma2 semaphore(%89 : memref<!tpu.dma_semaphore, #tpu.memory_space<semaphore_mem>>) src(%86 : memref<1x128xf32, #tpu.memory_space<any>>) dst(%87 : memref<1x128xf32, #tpu.memory_space<vmem>>)
    %c1_92 = arith.constant 1 : index
    %90 = memref.load %arg0[%c1_92] : memref<8xi32, #tpu.memory_space<smem>>
    %c0_i32_93 = arith.constant 0 : i32
    %c1_i32_94 = arith.constant 1 : i32
    %c0_i32_95 = arith.constant 0 : i32
    %91 = tpu.memref_slice %arg2[%90, %c0_i32_95] : memref<64x128xf32, #tpu.memory_space<any>> -> memref<1x128xf32, #tpu.memory_space<any>>
    %c1_i32_96 = arith.constant 1 : i32
    %c0_i32_97 = arith.constant 0 : i32
    %92 = tpu.memref_slice %arg11[%c1_i32_96, %c0_i32_97] : memref<8x128xf32, #tpu.memory_space<vmem>> -> memref<1x128xf32, #tpu.memory_space<vmem>>
    %93 = tpu.memref_slice %arg13[%c0_i32_93, %c1_i32_94] : memref<2x8x!tpu.dma_semaphore, #tpu.memory_space<semaphore_mem>> -> memref<1x1x!tpu.dma_semaphore, #tpu.memory_space<semaphore_mem>>
    %94 = tpu.memref_squeeze %93 : memref<1x1x!tpu.dma_semaphore, #tpu.memory_space<semaphore_mem>> -> memref<!tpu.dma_semaphore, #tpu.memory_space<semaphore_mem>>
    tpu.wait_dma2 semaphore(%94 : memref<!tpu.dma_semaphore, #tpu.memory_space<semaphore_mem>>) src(%91 : memref<1x128xf32, #tpu.memory_space<any>>) dst(%92 : memref<1x128xf32, #tpu.memory_space<vmem>>)
    %c1_98 = arith.constant 1 : index
    %95 = memref.load %arg1[%c1_98] : memref<8xi32, #tpu.memory_space<smem>>
    %c1_i32_99 = arith.constant 1 : i32
    %c1_i32_100 = arith.constant 1 : i32
    %c0_i32_101 = arith.constant 0 : i32
    %96 = tpu.memref_slice %arg3[%95, %c0_i32_101] : memref<2x128xf32, #tpu.memory_space<any>> -> memref<1x128xf32, #tpu.memory_space<any>>
    %c1_i32_102 = arith.constant 1 : i32
    %c0_i32_103 = arith.constant 0 : i32
    %97 = tpu.memref_slice %arg12[%c1_i32_102, %c0_i32_103] : memref<8x128xf32, #tpu.memory_space<vmem>> -> memref<1x128xf32, #tpu.memory_space<vmem>>
    %98 = tpu.memref_slice %arg13[%c1_i32_99, %c1_i32_100] : memref<2x8x!tpu.dma_semaphore, #tpu.memory_space<semaphore_mem>> -> memref<1x1x!tpu.dma_semaphore, #tpu.memory_space<semaphore_mem>>
    %99 = tpu.memref_squeeze %98 : memref<1x1x!tpu.dma_semaphore, #tpu.memory_space<semaphore_mem>> -> memref<!tpu.dma_semaphore, #tpu.memory_space<semaphore_mem>>
    tpu.wait_dma2 semaphore(%99 : memref<!tpu.dma_semaphore, #tpu.memory_space<semaphore_mem>>) src(%96 : memref<1x128xf32, #tpu.memory_space<any>>) dst(%97 : memref<1x128xf32, #tpu.memory_space<vmem>>)
    %c2_104 = arith.constant 2 : index
    %100 = memref.load %arg0[%c2_104] : memref<8xi32, #tpu.memory_space<smem>>
    %c0_i32_105 = arith.constant 0 : i32
    %c2_i32_106 = arith.constant 2 : i32
    %c0_i32_107 = arith.constant 0 : i32
    %101 = tpu.memref_slice %arg2[%100, %c0_i32_107] : memref<64x128xf32, #tpu.memory_space<any>> -> memref<1x128xf32, #tpu.memory_space<any>>
    %c2_i32_108 = arith.constant 2 : i32
    %c0_i32_109 = arith.constant 0 : i32
    %102 = tpu.memref_slice %arg11[%c2_i32_108, %c0_i32_109] : memref<8x128xf32, #tpu.memory_space<vmem>> -> memref<1x128xf32, #tpu.memory_space<vmem>>
    %103 = tpu.memref_slice %arg13[%c0_i32_105, %c2_i32_106] : memref<2x8x!tpu.dma_semaphore, #tpu.memory_space<semaphore_mem>> -> memref<1x1x!tpu.dma_semaphore, #tpu.memory_space<semaphore_mem>>
    %104 = tpu.memref_squeeze %103 : memref<1x1x!tpu.dma_semaphore, #tpu.memory_space<semaphore_mem>> -> memref<!tpu.dma_semaphore, #tpu.memory_space<semaphore_mem>>
    tpu.wait_dma2 semaphore(%104 : memref<!tpu.dma_semaphore, #tpu.memory_space<semaphore_mem>>) src(%101 : memref<1x128xf32, #tpu.memory_space<any>>) dst(%102 : memref<1x128xf32, #tpu.memory_space<vmem>>)
    %c2_110 = arith.constant 2 : index
    %105 = memref.load %arg1[%c2_110] : memref<8xi32, #tpu.memory_space<smem>>
    %c1_i32_111 = arith.constant 1 : i32
    %c2_i32_112 = arith.constant 2 : i32
    %c0_i32_113 = arith.constant 0 : i32
    %106 = tpu.memref_slice %arg3[%105, %c0_i32_113] : memref<2x128xf32, #tpu.memory_space<any>> -> memref<1x128xf32, #tpu.memory_space<any>>
    %c2_i32_114 = arith.constant 2 : i32
    %c0_i32_115 = arith.constant 0 : i32
    %107 = tpu.memref_slice %arg12[%c2_i32_114, %c0_i32_115] : memref<8x128xf32, #tpu.memory_space<vmem>> -> memref<1x128xf32, #tpu.memory_space<vmem>>
    %108 = tpu.memref_slice %arg13[%c1_i32_111, %c2_i32_112] : memref<2x8x!tpu.dma_semaphore, #tpu.memory_space<semaphore_mem>> -> memref<1x1x!tpu.dma_semaphore, #tpu.memory_space<semaphore_mem>>
    %109 = tpu.memref_squeeze %108 : memref<1x1x!tpu.dma_semaphore, #tpu.memory_space<semaphore_mem>> -> memref<!tpu.dma_semaphore, #tpu.memory_space<semaphore_mem>>
    tpu.wait_dma2 semaphore(%109 : memref<!tpu.dma_semaphore, #tpu.memory_space<semaphore_mem>>) src(%106 : memref<1x128xf32, #tpu.memory_space<any>>) dst(%107 : memref<1x128xf32, #tpu.memory_space<vmem>>)
    %c3_116 = arith.constant 3 : index
    %110 = memref.load %arg0[%c3_116] : memref<8xi32, #tpu.memory_space<smem>>
    %c0_i32_117 = arith.constant 0 : i32
    %c3_i32_118 = arith.constant 3 : i32
    %c0_i32_119 = arith.constant 0 : i32
    %111 = tpu.memref_slice %arg2[%110, %c0_i32_119] : memref<64x128xf32, #tpu.memory_space<any>> -> memref<1x128xf32, #tpu.memory_space<any>>
    %c3_i32_120 = arith.constant 3 : i32
    %c0_i32_121 = arith.constant 0 : i32
    %112 = tpu.memref_slice %arg11[%c3_i32_120, %c0_i32_121] : memref<8x128xf32, #tpu.memory_space<vmem>> -> memref<1x128xf32, #tpu.memory_space<vmem>>
    %113 = tpu.memref_slice %arg13[%c0_i32_117, %c3_i32_118] : memref<2x8x!tpu.dma_semaphore, #tpu.memory_space<semaphore_mem>> -> memref<1x1x!tpu.dma_semaphore, #tpu.memory_space<semaphore_mem>>
    %114 = tpu.memref_squeeze %113 : memref<1x1x!tpu.dma_semaphore, #tpu.memory_space<semaphore_mem>> -> memref<!tpu.dma_semaphore, #tpu.memory_space<semaphore_mem>>
    tpu.wait_dma2 semaphore(%114 : memref<!tpu.dma_semaphore, #tpu.memory_space<semaphore_mem>>) src(%111 : memref<1x128xf32, #tpu.memory_space<any>>) dst(%112 : memref<1x128xf32, #tpu.memory_space<vmem>>)
    %c3_122 = arith.constant 3 : index
    %115 = memref.load %arg1[%c3_122] : memref<8xi32, #tpu.memory_space<smem>>
    %c1_i32_123 = arith.constant 1 : i32
    %c3_i32_124 = arith.constant 3 : i32
    %c0_i32_125 = arith.constant 0 : i32
    %116 = tpu.memref_slice %arg3[%115, %c0_i32_125] : memref<2x128xf32, #tpu.memory_space<any>> -> memref<1x128xf32, #tpu.memory_space<any>>
    %c3_i32_126 = arith.constant 3 : i32
    %c0_i32_127 = arith.constant 0 : i32
    %117 = tpu.memref_slice %arg12[%c3_i32_126, %c0_i32_127] : memref<8x128xf32, #tpu.memory_space<vmem>> -> memref<1x128xf32, #tpu.memory_space<vmem>>
    %118 = tpu.memref_slice %arg13[%c1_i32_123, %c3_i32_124] : memref<2x8x!tpu.dma_semaphore, #tpu.memory_space<semaphore_mem>> -> memref<1x1x!tpu.dma_semaphore, #tpu.memory_space<semaphore_mem>>
    %119 = tpu.memref_squeeze %118 : memref<1x1x!tpu.dma_semaphore, #tpu.memory_space<semaphore_mem>> -> memref<!tpu.dma_semaphore, #tpu.memory_space<semaphore_mem>>
    tpu.wait_dma2 semaphore(%119 : memref<!tpu.dma_semaphore, #tpu.memory_space<semaphore_mem>>) src(%116 : memref<1x128xf32, #tpu.memory_space<any>>) dst(%117 : memref<1x128xf32, #tpu.memory_space<vmem>>)
    %c4_128 = arith.constant 4 : index
    %120 = memref.load %arg0[%c4_128] : memref<8xi32, #tpu.memory_space<smem>>
    %c0_i32_129 = arith.constant 0 : i32
    %c4_i32_130 = arith.constant 4 : i32
    %c0_i32_131 = arith.constant 0 : i32
    %121 = tpu.memref_slice %arg2[%120, %c0_i32_131] : memref<64x128xf32, #tpu.memory_space<any>> -> memref<1x128xf32, #tpu.memory_space<any>>
    %c4_i32_132 = arith.constant 4 : i32
    %c0_i32_133 = arith.constant 0 : i32
    %122 = tpu.memref_slice %arg11[%c4_i32_132, %c0_i32_133] : memref<8x128xf32, #tpu.memory_space<vmem>> -> memref<1x128xf32, #tpu.memory_space<vmem>>
    %123 = tpu.memref_slice %arg13[%c0_i32_129, %c4_i32_130] : memref<2x8x!tpu.dma_semaphore, #tpu.memory_space<semaphore_mem>> -> memref<1x1x!tpu.dma_semaphore, #tpu.memory_space<semaphore_mem>>
    %124 = tpu.memref_squeeze %123 : memref<1x1x!tpu.dma_semaphore, #tpu.memory_space<semaphore_mem>> -> memref<!tpu.dma_semaphore, #tpu.memory_space<semaphore_mem>>
    tpu.wait_dma2 semaphore(%124 : memref<!tpu.dma_semaphore, #tpu.memory_space<semaphore_mem>>) src(%121 : memref<1x128xf32, #tpu.memory_space<any>>) dst(%122 : memref<1x128xf32, #tpu.memory_space<vmem>>)
    %c4_134 = arith.constant 4 : index
    %125 = memref.load %arg1[%c4_134] : memref<8xi32, #tpu.memory_space<smem>>
    %c1_i32_135 = arith.constant 1 : i32
    %c4_i32_136 = arith.constant 4 : i32
    %c0_i32_137 = arith.constant 0 : i32
    %126 = tpu.memref_slice %arg3[%125, %c0_i32_137] : memref<2x128xf32, #tpu.memory_space<any>> -> memref<1x128xf32, #tpu.memory_space<any>>
    %c4_i32_138 = arith.constant 4 : i32
    %c0_i32_139 = arith.constant 0 : i32
    %127 = tpu.memref_slice %arg12[%c4_i32_138, %c0_i32_139] : memref<8x128xf32, #tpu.memory_space<vmem>> -> memref<1x128xf32, #tpu.memory_space<vmem>>
    %128 = tpu.memref_slice %arg13[%c1_i32_135, %c4_i32_136] : memref<2x8x!tpu.dma_semaphore, #tpu.memory_space<semaphore_mem>> -> memref<1x1x!tpu.dma_semaphore, #tpu.memory_space<semaphore_mem>>
    %129 = tpu.memref_squeeze %128 : memref<1x1x!tpu.dma_semaphore, #tpu.memory_space<semaphore_mem>> -> memref<!tpu.dma_semaphore, #tpu.memory_space<semaphore_mem>>
    tpu.wait_dma2 semaphore(%129 : memref<!tpu.dma_semaphore, #tpu.memory_space<semaphore_mem>>) src(%126 : memref<1x128xf32, #tpu.memory_space<any>>) dst(%127 : memref<1x128xf32, #tpu.memory_space<vmem>>)
    %c5_140 = arith.constant 5 : index
    %130 = memref.load %arg0[%c5_140] : memref<8xi32, #tpu.memory_space<smem>>
    %c0_i32_141 = arith.constant 0 : i32
    %c5_i32_142 = arith.constant 5 : i32
    %c0_i32_143 = arith.constant 0 : i32
    %131 = tpu.memref_slice %arg2[%130, %c0_i32_143] : memref<64x128xf32, #tpu.memory_space<any>> -> memref<1x128xf32, #tpu.memory_space<any>>
    %c5_i32_144 = arith.constant 5 : i32
    %c0_i32_145 = arith.constant 0 : i32
    %132 = tpu.memref_slice %arg11[%c5_i32_144, %c0_i32_145] : memref<8x128xf32, #tpu.memory_space<vmem>> -> memref<1x128xf32, #tpu.memory_space<vmem>>
    %133 = tpu.memref_slice %arg13[%c0_i32_141, %c5_i32_142] : memref<2x8x!tpu.dma_semaphore, #tpu.memory_space<semaphore_mem>> -> memref<1x1x!tpu.dma_semaphore, #tpu.memory_space<semaphore_mem>>
    %134 = tpu.memref_squeeze %133 : memref<1x1x!tpu.dma_semaphore, #tpu.memory_space<semaphore_mem>> -> memref<!tpu.dma_semaphore, #tpu.memory_space<semaphore_mem>>
    tpu.wait_dma2 semaphore(%134 : memref<!tpu.dma_semaphore, #tpu.memory_space<semaphore_mem>>) src(%131 : memref<1x128xf32, #tpu.memory_space<any>>) dst(%132 : memref<1x128xf32, #tpu.memory_space<vmem>>)
    %c5_146 = arith.constant 5 : index
    %135 = memref.load %arg1[%c5_146] : memref<8xi32, #tpu.memory_space<smem>>
    %c1_i32_147 = arith.constant 1 : i32
    %c5_i32_148 = arith.constant 5 : i32
    %c0_i32_149 = arith.constant 0 : i32
    %136 = tpu.memref_slice %arg3[%135, %c0_i32_149] : memref<2x128xf32, #tpu.memory_space<any>> -> memref<1x128xf32, #tpu.memory_space<any>>
    %c5_i32_150 = arith.constant 5 : i32
    %c0_i32_151 = arith.constant 0 : i32
    %137 = tpu.memref_slice %arg12[%c5_i32_150, %c0_i32_151] : memref<8x128xf32, #tpu.memory_space<vmem>> -> memref<1x128xf32, #tpu.memory_space<vmem>>
    %138 = tpu.memref_slice %arg13[%c1_i32_147, %c5_i32_148] : memref<2x8x!tpu.dma_semaphore, #tpu.memory_space<semaphore_mem>> -> memref<1x1x!tpu.dma_semaphore, #tpu.memory_space<semaphore_mem>>
    %139 = tpu.memref_squeeze %138 : memref<1x1x!tpu.dma_semaphore, #tpu.memory_space<semaphore_mem>> -> memref<!tpu.dma_semaphore, #tpu.memory_space<semaphore_mem>>
    tpu.wait_dma2 semaphore(%139 : memref<!tpu.dma_semaphore, #tpu.memory_space<semaphore_mem>>) src(%136 : memref<1x128xf32, #tpu.memory_space<any>>) dst(%137 : memref<1x128xf32, #tpu.memory_space<vmem>>)
    %c6_152 = arith.constant 6 : index
    %140 = memref.load %arg0[%c6_152] : memref<8xi32, #tpu.memory_space<smem>>
    %c0_i32_153 = arith.constant 0 : i32
    %c6_i32_154 = arith.constant 6 : i32
    %c0_i32_155 = arith.constant 0 : i32
    %141 = tpu.memref_slice %arg2[%140, %c0_i32_155] : memref<64x128xf32, #tpu.memory_space<any>> -> memref<1x128xf32, #tpu.memory_space<any>>
    %c6_i32_156 = arith.constant 6 : i32
    %c0_i32_157 = arith.constant 0 : i32
    %142 = tpu.memref_slice %arg11[%c6_i32_156, %c0_i32_157] : memref<8x128xf32, #tpu.memory_space<vmem>> -> memref<1x128xf32, #tpu.memory_space<vmem>>
    %143 = tpu.memref_slice %arg13[%c0_i32_153, %c6_i32_154] : memref<2x8x!tpu.dma_semaphore, #tpu.memory_space<semaphore_mem>> -> memref<1x1x!tpu.dma_semaphore, #tpu.memory_space<semaphore_mem>>
    %144 = tpu.memref_squeeze %143 : memref<1x1x!tpu.dma_semaphore, #tpu.memory_space<semaphore_mem>> -> memref<!tpu.dma_semaphore, #tpu.memory_space<semaphore_mem>>
    tpu.wait_dma2 semaphore(%144 : memref<!tpu.dma_semaphore, #tpu.memory_space<semaphore_mem>>) src(%141 : memref<1x128xf32, #tpu.memory_space<any>>) dst(%142 : memref<1x128xf32, #tpu.memory_space<vmem>>)
    %c6_158 = arith.constant 6 : index
    %145 = memref.load %arg1[%c6_158] : memref<8xi32, #tpu.memory_space<smem>>
    %c1_i32_159 = arith.constant 1 : i32
    %c6_i32_160 = arith.constant 6 : i32
    %c0_i32_161 = arith.constant 0 : i32
    %146 = tpu.memref_slice %arg3[%145, %c0_i32_161] : memref<2x128xf32, #tpu.memory_space<any>> -> memref<1x128xf32, #tpu.memory_space<any>>
    %c6_i32_162 = arith.constant 6 : i32
    %c0_i32_163 = arith.constant 0 : i32
    %147 = tpu.memref_slice %arg12[%c6_i32_162, %c0_i32_163] : memref<8x128xf32, #tpu.memory_space<vmem>> -> memref<1x128xf32, #tpu.memory_space<vmem>>
    %148 = tpu.memref_slice %arg13[%c1_i32_159, %c6_i32_160] : memref<2x8x!tpu.dma_semaphore, #tpu.memory_space<semaphore_mem>> -> memref<1x1x!tpu.dma_semaphore, #tpu.memory_space<semaphore_mem>>
    %149 = tpu.memref_squeeze %148 : memref<1x1x!tpu.dma_semaphore, #tpu.memory_space<semaphore_mem>> -> memref<!tpu.dma_semaphore, #tpu.memory_space<semaphore_mem>>
    tpu.wait_dma2 semaphore(%149 : memref<!tpu.dma_semaphore, #tpu.memory_space<semaphore_mem>>) src(%146 : memref<1x128xf32, #tpu.memory_space<any>>) dst(%147 : memref<1x128xf32, #tpu.memory_space<vmem>>)
    %c7_164 = arith.constant 7 : index
    %150 = memref.load %arg0[%c7_164] : memref<8xi32, #tpu.memory_space<smem>>
    %c0_i32_165 = arith.constant 0 : i32
    %c7_i32_166 = arith.constant 7 : i32
    %c0_i32_167 = arith.constant 0 : i32
    %151 = tpu.memref_slice %arg2[%150, %c0_i32_167] : memref<64x128xf32, #tpu.memory_space<any>> -> memref<1x128xf32, #tpu.memory_space<any>>
    %c7_i32_168 = arith.constant 7 : i32
    %c0_i32_169 = arith.constant 0 : i32
    %152 = tpu.memref_slice %arg11[%c7_i32_168, %c0_i32_169] : memref<8x128xf32, #tpu.memory_space<vmem>> -> memref<1x128xf32, #tpu.memory_space<vmem>>
    %153 = tpu.memref_slice %arg13[%c0_i32_165, %c7_i32_166] : memref<2x8x!tpu.dma_semaphore, #tpu.memory_space<semaphore_mem>> -> memref<1x1x!tpu.dma_semaphore, #tpu.memory_space<semaphore_mem>>
    %154 = tpu.memref_squeeze %153 : memref<1x1x!tpu.dma_semaphore, #tpu.memory_space<semaphore_mem>> -> memref<!tpu.dma_semaphore, #tpu.memory_space<semaphore_mem>>
    tpu.wait_dma2 semaphore(%154 : memref<!tpu.dma_semaphore, #tpu.memory_space<semaphore_mem>>) src(%151 : memref<1x128xf32, #tpu.memory_space<any>>) dst(%152 : memref<1x128xf32, #tpu.memory_space<vmem>>)
    %c7_170 = arith.constant 7 : index
    %155 = memref.load %arg1[%c7_170] : memref<8xi32, #tpu.memory_space<smem>>
    %c1_i32_171 = arith.constant 1 : i32
    %c7_i32_172 = arith.constant 7 : i32
    %c0_i32_173 = arith.constant 0 : i32
    %156 = tpu.memref_slice %arg3[%155, %c0_i32_173] : memref<2x128xf32, #tpu.memory_space<any>> -> memref<1x128xf32, #tpu.memory_space<any>>
    %c7_i32_174 = arith.constant 7 : i32
    %c0_i32_175 = arith.constant 0 : i32
    %157 = tpu.memref_slice %arg12[%c7_i32_174, %c0_i32_175] : memref<8x128xf32, #tpu.memory_space<vmem>> -> memref<1x128xf32, #tpu.memory_space<vmem>>
    %158 = tpu.memref_slice %arg13[%c1_i32_171, %c7_i32_172] : memref<2x8x!tpu.dma_semaphore, #tpu.memory_space<semaphore_mem>> -> memref<1x1x!tpu.dma_semaphore, #tpu.memory_space<semaphore_mem>>
    %159 = tpu.memref_squeeze %158 : memref<1x1x!tpu.dma_semaphore, #tpu.memory_space<semaphore_mem>> -> memref<!tpu.dma_semaphore, #tpu.memory_space<semaphore_mem>>
    tpu.wait_dma2 semaphore(%159 : memref<!tpu.dma_semaphore, #tpu.memory_space<semaphore_mem>>) src(%156 : memref<1x128xf32, #tpu.memory_space<any>>) dst(%157 : memref<1x128xf32, #tpu.memory_space<vmem>>)
    %c0_176 = arith.constant 0 : index
    %c0_177 = arith.constant 0 : index
    %160 = vector.load %arg11[%c0_176, %c0_177] : memref<8x128xf32, #tpu.memory_space<vmem>>, vector<8x128xf32>
    %c0_178 = arith.constant 0 : index
    %c0_179 = arith.constant 0 : index
    %161 = vector.load %arg12[%c0_178, %c0_179] : memref<8x128xf32, #tpu.memory_space<vmem>>, vector<8x128xf32>
    %162 = arith.addf %160, %161 : vector<8x128xf32>
    %163 = arith.truncf %162 : vector<8x128xf32> to vector<8x128xbf16>
    %c0_180 = arith.constant 0 : index
    %c0_181 = arith.constant 0 : index
    %164 = vector.load %arg4[%c0_180, %c0_181] : memref<128x128xbf16, #tpu.memory_space<vmem>>, vector<128x128xbf16>
    %cst = arith.constant dense<0.000000e+00> : vector<8x128xf32>
    %165 = tpu.matmul %163, %164, %cst {dimension_numbers = #tpu.dot_dimension_numbers<[1], [0], [0], [1], [0, 0, 1, 1], [], []>} : vector<8x128xbf16>, vector<128x128xbf16>, vector<8x128xf32> -> vector<8x128xf32>
    %c0_182 = arith.constant 0 : index
    %c0_183 = arith.constant 0 : index
    %166 = vector.load %arg5[%c0_182, %c0_183] : memref<1x128xf32, #tpu.memory_space<vmem>>, vector<1x128xf32>
    %167 = vector.broadcast %166 : vector<1x128xf32> to vector<8x128xf32>
    %168 = arith.addf %165, %167 : vector<8x128xf32>
    %169 = math.tanh %168 : vector<8x128xf32>
    %170 = arith.truncf %169 : vector<8x128xf32> to vector<8x128xbf16>
    %c0_184 = arith.constant 0 : index
    %c0_185 = arith.constant 0 : index
    %171 = vector.load %arg6[%c0_184, %c0_185] : memref<128x128xbf16, #tpu.memory_space<vmem>>, vector<128x128xbf16>
    %cst_186 = arith.constant dense<0.000000e+00> : vector<8x128xf32>
    %172 = tpu.matmul %170, %171, %cst_186 {dimension_numbers = #tpu.dot_dimension_numbers<[1], [0], [0], [1], [0, 0, 1, 1], [], []>} : vector<8x128xbf16>, vector<128x128xbf16>, vector<8x128xf32> -> vector<8x128xf32>
    %c0_187 = arith.constant 0 : index
    %c0_188 = arith.constant 0 : index
    %173 = vector.load %arg7[%c0_187, %c0_188] : memref<1x128xf32, #tpu.memory_space<vmem>>, vector<1x128xf32>
    %174 = vector.broadcast %173 : vector<1x128xf32> to vector<8x128xf32>
    %175 = arith.addf %172, %174 : vector<8x128xf32>
    %cst_189 = arith.constant 0.000000e+00 : f32
    %176 = vector.broadcast %cst_189 : f32 to vector<8x128xf32>
    %177 = arith.maximumf %175, %176 : vector<8x128xf32>
    %178 = arith.truncf %177 : vector<8x128xf32> to vector<8x128xbf16>
    %c0_190 = arith.constant 0 : index
    %c0_191 = arith.constant 0 : index
    %179 = vector.load %arg8[%c0_190, %c0_191] : memref<128x128xbf16, #tpu.memory_space<vmem>>, vector<128x128xbf16>
    %cst_192 = arith.constant dense<0.000000e+00> : vector<8x128xf32>
    %180 = tpu.matmul %178, %179, %cst_192 {dimension_numbers = #tpu.dot_dimension_numbers<[1], [0], [0], [1], [0, 0, 1, 1], [], []>} : vector<8x128xbf16>, vector<128x128xbf16>, vector<8x128xf32> -> vector<8x128xf32>
    %c0_193 = arith.constant 0 : index
    %c0_194 = arith.constant 0 : index
    %181 = vector.load %arg9[%c0_193, %c0_194] : memref<1x128xf32, #tpu.memory_space<vmem>>, vector<1x128xf32>
    %182 = vector.broadcast %181 : vector<1x128xf32> to vector<8x128xf32>
    %183 = arith.addf %180, %182 : vector<8x128xf32>
    %c0_195 = arith.constant 0 : index
    %c0_196 = arith.constant 0 : index
    %184 = vector.load %arg10[%c0_195, %c0_196] : memref<8x128xf32, #tpu.memory_space<vmem>>, vector<8x128xf32>
    tpu.vector_store %arg10[%c0_195, %c0_196], %183 {strides = array<i32>} : memref<8x128xf32, #tpu.memory_space<vmem>>, vector<8x128xf32>,
    return
  }
}

</mosaic_0001>

<llo_original>
// kernel: _forward.1
$region0: #{_forward.1}
  #allocation0 [shape = 'u32[]', space=smem, size = 0x4, offset = 0x4, fixed_abs, tag = 'smem constant byte address 0x4 - core index']
  #allocation1 [shape = 'u32[144,128]{1,0:T(1,128)}', space=vmem, size = 0x12000, scoped, tag = 'internal scratch']
  #allocation2 [shape = 'f32[8,128]{1,0:T(8,128)}', space=vmem, size = 0x1000, scoped, tag = 'scratch operand']
  #allocation3 [shape = 'f32[8,128]{1,0:T(8,128)}', space=vmem, size = 0x1000, scoped, tag = 'scratch operand']
  #allocation4 [shape = 's32[16]{0}', space=sflag, size = 0x40, scoped, tag = 'scratch operand']
  #allocation14 [shape = 's32[]', space=sflag, size = 0x4, offset = 0, fixed_abs, tag = 'sflag constant byte address 0x0 - dummy sync flag']
  #allocation15 [shape = 's32[]', space=sflag, size = 0x4, offset = 0, fixed_abs, tag = 'sflag constant byte address 0x0 - dummy sync flag']
  #allocation16 [shape = 'u32[]', space=smem, size = 0x4, offset = 0x44, fixed_abs, tag = 'smem constant byte address 0x44 - assertion arg 0']
  #allocation17 [shape = 'u32[]', space=smem, size = 0x4, offset = 0x48, fixed_abs, tag = 'smem constant byte address 0x48 - assertion arg 1']
  #allocation18 [shape = 's32[]', space=sflag, size = 0x4, offset = 0, fixed_abs, tag = 'sflag constant byte address 0x0 - dummy sync flag']
  #allocation19 [shape = 's32[]', space=sflag, size = 0x4, offset = 0, fixed_abs, tag = 'sflag constant byte address 0x0 - dummy sync flag']
  #allocation20 [shape = 's32[]', space=sflag, size = 0x4, offset = 0, fixed_abs, tag = 'sflag constant byte address 0x0 - dummy sync flag']
  #allocation21 [shape = 's32[]', space=sflag, size = 0x4, offset = 0, fixed_abs, tag = 'sflag constant byte address 0x0 - dummy sync flag']
  #allocation22 [shape = 's32[]', space=sflag, size = 0x4, offset = 0, fixed_abs, tag = 'sflag constant byte address 0x0 - dummy sync flag']
  #allocation23 [shape = 's32[]', space=sflag, size = 0x4, offset = 0, fixed_abs, tag = 'sflag constant byte address 0x0 - dummy sync flag']
  #allocation24 [shape = 's32[]', space=sflag, size = 0x4, offset = 0, fixed_abs, tag = 'sflag constant byte address 0x0 - dummy sync flag']
  #allocation25 [shape = 's32[]', space=sflag, size = 0x4, offset = 0, fixed_abs, tag = 'sflag constant byte address 0x0 - dummy sync flag']
  #allocation26 [shape = 's32[]', space=sflag, size = 0x4, offset = 0, fixed_abs, tag = 'sflag constant byte address 0x0 - dummy sync flag']
  #allocation27 [shape = 's32[]', space=sflag, size = 0x4, offset = 0, fixed_abs, tag = 'sflag constant byte address 0x0 - dummy sync flag']
  #allocation28 [shape = 's32[]', space=sflag, size = 0x4, offset = 0, fixed_abs, tag = 'sflag constant byte address 0x0 - dummy sync flag']
  #allocation29 [shape = 's32[]', space=sflag, size = 0x4, offset = 0, fixed_abs, tag = 'sflag constant byte address 0x0 - dummy sync flag']
  #allocation30 [shape = 's32[]', space=sflag, size = 0x4, offset = 0, fixed_abs, tag = 'sflag constant byte address 0x0 - dummy sync flag']
  #allocation31 [shape = 's32[]', space=sflag, size = 0x4, offset = 0, fixed_abs, tag = 'sflag constant byte address 0x0 - dummy sync flag']
  #allocation32 [shape = 's32[]', space=sflag, size = 0x4, offset = 0, fixed_abs, tag = 'sflag constant byte address 0x0 - dummy sync flag']
  #allocation33 [shape = 's32[]', space=sflag, size = 0x4, offset = 0, fixed_abs, tag = 'sflag constant byte address 0x0 - dummy sync flag']
  #allocation34 [shape = 's32[]', space=sflag, size = 0x4, offset = 0, fixed_abs, tag = 'sflag constant byte address 0x0 - dummy sync flag']
  #allocation35 [shape = 's32[]', space=sflag, size = 0x4, offset = 0, fixed_abs, tag = 'sflag constant byte address 0x0 - dummy sync flag']
  #allocation36 [shape = 's32[]', space=sflag, size = 0x4, offset = 0, fixed_abs, tag = 'sflag constant byte address 0x0 - dummy sync flag']
  #allocation37 [shape = 's32[]', space=sflag, size = 0x4, offset = 0, fixed_abs, tag = 'sflag constant byte address 0x0 - dummy sync flag']
  #allocation38 [shape = 's32[]', space=sflag, size = 0x4, offset = 0, fixed_abs, tag = 'sflag constant byte address 0x0 - dummy sync flag']
  #allocation39 [shape = 's32[]', space=sflag, size = 0x4, offset = 0, fixed_abs, tag = 'sflag constant byte address 0x0 - dummy sync flag']
  %s0 = inlined_call_operand.vmem [shape: s32[8], index: 0, kind: input, shape index: {}]
  %s1 = inlined_call_operand.vmem [shape: s32[8], index: 1, kind: input, shape index: {}]
  %s2 = inlined_call_operand.hbm [shape: f32[64,128], index: 2, kind: input, shape index: {}]
  %s3 = inlined_call_operand.vmem [shape: f32[2,128], index: 3, kind: input, shape index: {}]
  %s4 = inlined_call_operand.hbm [shape: bf16[128,128], index: 4, kind: input, shape index: {}]
  %s5 = inlined_call_operand.vmem [shape: f32[1,128], index: 5, kind: input, shape index: {}]
  %s6 = inlined_call_operand.hbm [shape: bf16[128,128], index: 6, kind: input, shape index: {}]
  %s7 = inlined_call_operand.vmem [shape: f32[1,128], index: 7, kind: input, shape index: {}]
  %s8 = inlined_call_operand.hbm [shape: bf16[128,128], index: 8, kind: input, shape index: {}]
  %s9 = inlined_call_operand.vmem [shape: f32[1,128], index: 9, kind: input, shape index: {}]
  %s10 = inlined_call_operand.vmem [shape: f32[8,128], index: 10, kind: output, shape index: {}]
  %s11 = sld [smem:[#allocation0]]
  $region334: #{_forward.1} parent=0
    _
  %s13 = ssub.s32 1, %s11
  %s14 = scalar_select 0, %s13, %s11
  $region1: #{_forward.1} parent=0
    #allocation5 [shape = 'u8[512]{0}', space=smem, size = 0x200, scoped, tag = 'input window, operand 0, single buffered']
    #allocation6 [shape = 's32[1]{0}', space=sflag, size = 0x4, scoped, tag = 'scoped memory for _forward.1']
    #allocation7 [shape = 's32[1]{0}', space=sflag, size = 0x4, scoped, tag = 'scoped memory for _forward.1']
    #allocation8 [shape = 'u8[512]{0}', space=smem, size = 0x200, scoped, tag = 'input window, operand 1, single buffered']
    #allocation9 [shape = 's32[1]{0}', space=sflag, size = 0x4, scoped, tag = 'scoped memory for _forward.1']
    #allocation10 [shape = 'u8[32768]{0}', space=vmem, size = 0x8000, scoped, tag = 'input window, operand 4, single buffered']
    #allocation11 [shape = 'u8[32768]{0}', space=vmem, size = 0x8000, scoped, tag = 'input window, operand 6, single buffered']
    #allocation12 [shape = 's32[1]{0}', space=sflag, size = 0x4, scoped, tag = 'scoped memory for _forward.1']
    #allocation13 [shape = 'u8[32768]{0}', space=vmem, size = 0x8000, scoped, tag = 'input window, operand 8, single buffered']
    %15 = vsyncpa [#allocation7], 0
    %16 = vsyncpa [#allocation9], 0
    %17 = vsyncpa [#allocation6], 0
    %18 = vsyncpa [#allocation12], 0
    // Predicated region
    $region2: #{_forward.1} parent=1 // pred_check
      _
    $region3: #{_forward.1} parent=1 // pred_check_branch
      %20 = sbr.rel (0) target = $region5
    $region4: #{_forward.1} parent=1 // pred_region
      %s22 = ssub.s32 16, 16
      %23 = vsyncadd [#allocation7], %s22
      %s25 = sshll.u32 %s0, 4
      %s26 = int_to_ptr.vmem [resolvable:$true] %s25
      %28 = dma.vmem_to_smem %s26, 16, [#allocation5], [#allocation7]
    $region5: #{_forward.1} parent=1 // pred_fallthru
      _
    // Predicated region
    $region6: #{_forward.1} parent=1 // pred_check
      _
    $region7: #{_forward.1} parent=1 // pred_check_branch
      %30 = sbr.rel (0) target = $region9
    $region8: #{_forward.1} parent=1 // pred_region
      %s32 = ssub.s32 16, 16
      %33 = vsyncadd [#allocation9], %s32
      %s35 = sshll.u32 %s1, 4
      %s36 = int_to_ptr.vmem [resolvable:$true] %s35
      %38 = dma.vmem_to_smem %s36, 16, [#allocation8], [#allocation9]
    $region9: #{_forward.1} parent=1 // pred_fallthru
      _
    // Predicated region
    $region10: #{_forward.1} parent=1 // pred_check
      _
    $region11: #{_forward.1} parent=1 // pred_check_branch
      %40 = sbr.rel (0) target = $region13
    $region12: #{_forward.1} parent=1 // pred_region
      %s42 = ssub.s32 1024, 1024
      %43 = vsyncadd [#allocation6], %s42
      %s44 = sshll.u32 [#allocation10], 4
      %s45 = int_to_ptr.vmem [resolvable:$true] %s44
      %50 = dma.hbm_to_vmem [thread:$0]  %s4, 1024, %s45, [#allocation6], 64, 64, 4
    $region13: #{_forward.1} parent=1 // pred_fallthru
      _
    // Predicated region
    $region14: #{_forward.1} parent=1 // pred_check
      _
    $region15: #{_forward.1} parent=1 // pred_check_branch
      %52 = sbr.rel (0) target = $region17
    $region16: #{_forward.1} parent=1 // pred_region
      _
    $region17: #{_forward.1} parent=1 // pred_fallthru
      _
    // Predicated region
    $region18: #{_forward.1} parent=1 // pred_check
      _
    $region19: #{_forward.1} parent=1 // pred_check_branch
      %54 = sbr.rel (0) target = $region21
    $region20: #{_forward.1} parent=1 // pred_region
      %s56 = ssub.s32 1024, 1024
      %57 = vsyncadd [#allocation12], %s56
      %s58 = sshll.u32 [#allocation11], 4
      %s59 = int_to_ptr.vmem [resolvable:$true] %s58
      %64 = dma.hbm_to_vmem [thread:$0]  %s6, 1024, %s59, [#allocation12], 64, 64, 4
    $region21: #{_forward.1} parent=1 // pred_fallthru
      _
    // Predicated region
    $region22: #{_forward.1} parent=1 // pred_check
      _
    $region23: #{_forward.1} parent=1 // pred_check_branch
      %66 = sbr.rel (0) target = $region25
    $region24: #{_forward.1} parent=1 // pred_region
      _
    $region25: #{_forward.1} parent=1 // pred_fallthru
      _
    // Predicated region
    $region26: #{_forward.1} parent=1 // pred_check
      _
    $region27: #{_forward.1} parent=1 // pred_check_branch
      %68 = sbr.rel (0) target = $region29
    $region28: #{_forward.1} parent=1 // pred_region
      %s70 = ssub.s32 1024, 1024
      %71 = vsyncadd [#allocation12], %s70
      %s72 = sshll.u32 [#allocation13], 4
      %s73 = int_to_ptr.vmem [resolvable:$true] %s72
      %78 = dma.hbm_to_vmem [thread:$0]  %s8, 1024, %s73, [#allocation12], 64, 64, 4
    $region29: #{_forward.1} parent=1 // pred_fallthru
      _
    // Predicated region
    $region30: #{_forward.1} parent=1 // pred_check
      _
    $region31: #{_forward.1} parent=1 // pred_check_branch
      %80 = sbr.rel (0) target = $region33
    $region32: #{_forward.1} parent=1 // pred_region
      _
    $region33: #{_forward.1} parent=1 // pred_fallthru
      _
    // Predicated region
    $region34: #{_forward.1} parent=1 // pred_check
      _
    $region35: #{_forward.1} parent=1 // pred_check_branch
      %82 = sbr.rel (0) target = $region37
    $region36: #{_forward.1} parent=1 // pred_region
      %83 = dma.done [#allocation7], 16
    $region37: #{_forward.1} parent=1 // pred_fallthru
      _
    // Predicated region
    $region38: #{_forward.1} parent=1 // pred_check
      _
    $region39: #{_forward.1} parent=1 // pred_check_branch
      %85 = sbr.rel (0) target = $region41
    $region40: #{_forward.1} parent=1 // pred_region
      %86 = dma.done [#allocation9], 16
    $region41: #{_forward.1} parent=1 // pred_fallthru
      _
    // Predicated region
    $region42: #{_forward.1} parent=1 // pred_check
      _
    $region43: #{_forward.1} parent=1 // pred_check_branch
      %88 = sbr.rel (0) target = $region45
    $region44: #{_forward.1} parent=1 // pred_region
      %89 = dma.done [#allocation6], 1024
    $region45: #{_forward.1} parent=1 // pred_fallthru
      _
    // Predicated region
    $region46: #{_forward.1} parent=1 // pred_check
      _
    $region47: #{_forward.1} parent=1 // pred_check_branch
      %91 = sbr.rel (0) target = $region49
    $region48: #{_forward.1} parent=1 // pred_region
      %92 = dma.done [#allocation12], 1024
    $region49: #{_forward.1} parent=1 // pred_fallthru
      _
    // Predicated region
    $region50: #{_forward.1} parent=1 // pred_check
      _
    $region51: #{_forward.1} parent=1 // pred_check_branch
      %94 = sbr.rel (0) target = $region53
    $region52: #{_forward.1} parent=1 // pred_region
      %95 = dma.done [#allocation12], 1024
    $region53: #{_forward.1} parent=1 // pred_fallthru
      _
    %96 = sfence
    %s98 = sld [smem:[#allocation5]]
    %s99 = smul.addr %s98, 16
    %s100 = scalar_lea.hbm %s2, %s99
    // Predicated region
    $region54: #{_forward.1} parent=1 // pred_check
      _
    $region55: #{_forward.1} parent=1 // pred_check_branch
      %102 = sbr.rel target = $region57
    $region56: #{_forward.1} parent=1 // pred_region
      %103 = sst [smem:[#allocation16]] [#allocation15]
      %104 = sst [smem:[#allocation17]] [#allocation14]
    $region57: #{_forward.1} parent=1 // pred_fallthru
      _
    %106 = shalt.err (0)
    %s108 = sshll.u32 [#allocation2], 4
    %s109 = int_to_ptr.vmem [resolvable:$true] %s108
    %111 = dma.hbm_to_vmem [thread:$0]  %s100, 16, %s109, [#allocation4]
    %s112 = sld [smem:[#allocation8]]
    %s113 = scalar_lea.vmem %s3, %s112
    %s114 = scalar_lea.sflag [#allocation4], 8
    %p116 = scmp.lt.u32.totalorder 1, 8
    %p117 = pneg %p116
    // Predicated region
    $region58: #{_forward.1} parent=1 // pred_check
      _
    $region59: #{_forward.1} parent=1 // pred_check_branch
      %119 = sbr.rel (%p116) target = $region61
    $region60: #{_forward.1} parent=1 // pred_region
      %s134 = sand.u32 1, 7
      %p135 = scmp.eq.s32.totalorder %s134, 0
      %p136 = pneg %p135
      // Predicated region
      $region73: #{_forward.1} parent=60 // pred_check
        _
      $region74: #{_forward.1} parent=60 // pred_check_branch
        %138 = sbr.rel (%p135) target = $region76
      $region75: #{_forward.1} parent=60 // pred_region
        %s139 = sand.u32 1, 7
        %s140 = ssub.s32 1, %s139
        %s141 = scalar_lea.vmem %s113, %s140
        %s142 = ssub.s32 1, %s139
        %s143 = scalar_lea.vmem [#allocation3], %s142
        %s144 = sshllo.u32 0, %s139
        loop: start=0, step=1, limit=1
        $region77: #{_forward.1} parent=75 // loop_pre_header
          _
        $region78: #{_forward.1} parent=75 // loop_header
          %s146 = sphi 0, %s150
          %p147 = scmp.ge.s32.totalorder %s146, 1
          %s151 = sphi %s141, %s141
          %s152 = sphi %s143, %s143
        $region79: #{_forward.1} parent=75 // loop_header_branch
          %149 = sbr.rel (%p147) target = $region83
        $region80: #{_forward.1} parent=75 // loop_body
          %v153 = vld [vmem:[%s151] sm:%s144]
          %154 = vst [vmem:[%s152] sm:%s144] %v153
        $region81: #{_forward.1} parent=75 // loop_footer
          %s150 = sadd.s32 1, %s146
        $region82: #{_forward.1} parent=75 // loop_footer_branch
          %145 = sbr.rel target = $region78
        $region83: #{_forward.1} parent=75 // loop_exit
          _
      $region76: #{_forward.1} parent=60 // pred_fallthru
        _
    $region61: #{_forward.1} parent=1 // pred_fallthru
      _
    // Predicated region
    $region62: #{_forward.1} parent=1 // pred_check
      %p120 = pneg %p116
    $region63: #{_forward.1} parent=1 // pred_check_branch
      %122 = sbr.rel (%p120) target = $region65
    $region64: #{_forward.1} parent=1 // pred_region
      %s123 = sshllo.u32 0, 1
      loop: start=0, step=1, limit=1
      $region66: #{_forward.1} parent=64 // loop_pre_header
        _
      $region67: #{_forward.1} parent=64 // loop_header
        %s125 = sphi 0, %s129
        %p126 = scmp.ge.s32.totalorder %s125, 1
        %s130 = sphi %s113, %s113
        %s131 = sphi [#allocation3], [#allocation3]
      $region68: #{_forward.1} parent=64 // loop_header_branch
        %128 = sbr.rel (%p126) target = $region72
      $region69: #{_forward.1} parent=64 // loop_body
        %v132 = vld [vmem:[%s130] sm:%s123]
        %133 = vst [vmem:[%s131] sm:%s123] %v132
      $region70: #{_forward.1} parent=64 // loop_footer
        %s129 = sadd.s32 1, %s125
      $region71: #{_forward.1} parent=64 // loop_footer_branch
        %124 = sbr.rel target = $region67
      $region72: #{_forward.1} parent=64 // loop_exit
        _
    $region65: #{_forward.1} parent=1 // pred_fallthru
      _
    // Predicated region
    $region84: #{_forward.1} parent=1 // pred_check
      _
    $region85: #{_forward.1} parent=1 // pred_check_branch
      %157 = sbr.rel (0) target = $region87
    $region86: #{_forward.1} parent=1 // pred_region
      %158 = vsyncadd %s114, 16
    $region87: #{_forward.1} parent=1 // pred_fallthru
      _
    %s159 = sld [smem:[#allocation5 + $0x1]]
    %s160 = smul.addr %s159, 16
    %s161 = scalar_lea.hbm %s2, %s160
    %s162 = scalar_lea.vmem [#allocation2], 1
    %s163 = scalar_lea.sflag [#allocation4], 1
    // Predicated region
    $region88: #{_forward.1} parent=1 // pred_check
      _
    $region89: #{_forward.1} parent=1 // pred_check_branch
      %165 = sbr.rel target = $region91
    $region90: #{_forward.1} parent=1 // pred_region
      %166 = sst [smem:[#allocation16]] [#allocation20]
      %167 = sst [smem:[#allocation17]] [#allocation19]
    $region91: #{_forward.1} parent=1 // pred_fallthru
      _
    %169 = shalt.err (0)
    %s171 = sshll.u32 %s162, 4
    %s172 = int_to_ptr.vmem [resolvable:$true] %s171
    %174 = dma.hbm_to_vmem [thread:$0]  %s161, 16, %s172, %s163
    %s175 = sld [smem:[#allocation8 + $0x1]]
    %s176 = scalar_lea.vmem %s3, %s175
    %s177 = scalar_lea.vmem [#allocation3], 1
    %s178 = scalar_lea.sflag [#allocation4], 9
    %p180 = scmp.lt.u32.totalorder 1, 8
    %p181 = pneg %p180
    // Predicated region
    $region92: #{_forward.1} parent=1 // pred_check
      _
    $region93: #{_forward.1} parent=1 // pred_check_branch
      %183 = sbr.rel (%p180) target = $region95
    $region94: #{_forward.1} parent=1 // pred_region
      %s198 = sand.u32 1, 7
      %p199 = scmp.eq.s32.totalorder %s198, 0
      %p200 = pneg %p199
      // Predicated region
      $region107: #{_forward.1} parent=94 // pred_check
        _
      $region108: #{_forward.1} parent=94 // pred_check_branch
        %202 = sbr.rel (%p199) target = $region110
      $region109: #{_forward.1} parent=94 // pred_region
        %s203 = sand.u32 1, 7
        %s204 = ssub.s32 1, %s203
        %s205 = scalar_lea.vmem %s176, %s204
        %s206 = ssub.s32 1, %s203
        %s207 = scalar_lea.vmem %s177, %s206 [#allocation3]
        %s208 = sshllo.u32 0, %s203
        loop: start=0, step=1, limit=1
        $region111: #{_forward.1} parent=109 // loop_pre_header
          _
        $region112: #{_forward.1} parent=109 // loop_header
          %s210 = sphi 0, %s214
          %p211 = scmp.ge.s32.totalorder %s210, 1
          %s215 = sphi %s205, %s205
          %s216 = sphi %s207, %s207
        $region113: #{_forward.1} parent=109 // loop_header_branch
          %213 = sbr.rel (%p211) target = $region117
        $region114: #{_forward.1} parent=109 // loop_body
          %v217 = vld [vmem:[%s215] sm:%s208]
          %218 = vst [vmem:[%s216] sm:%s208] %v217
        $region115: #{_forward.1} parent=109 // loop_footer
          %s214 = sadd.s32 1, %s210
        $region116: #{_forward.1} parent=109 // loop_footer_branch
          %209 = sbr.rel target = $region112
        $region117: #{_forward.1} parent=109 // loop_exit
          _
      $region110: #{_forward.1} parent=94 // pred_fallthru
        _
    $region95: #{_forward.1} parent=1 // pred_fallthru
      _
    // Predicated region
    $region96: #{_forward.1} parent=1 // pred_check
      %p184 = pneg %p180
    $region97: #{_forward.1} parent=1 // pred_check_branch
      %186 = sbr.rel (%p184) target = $region99
    $region98: #{_forward.1} parent=1 // pred_region
      %s187 = sshllo.u32 0, 1
      loop: start=0, step=1, limit=1
      $region100: #{_forward.1} parent=98 // loop_pre_header
        _
      $region101: #{_forward.1} parent=98 // loop_header
        %s189 = sphi 0, %s193
        %p190 = scmp.ge.s32.totalorder %s189, 1
        %s194 = sphi %s176, %s176
        %s195 = sphi %s177, %s177
      $region102: #{_forward.1} parent=98 // loop_header_branch
        %192 = sbr.rel (%p190) target = $region106
      $region103: #{_forward.1} parent=98 // loop_body
        %v196 = vld [vmem:[%s194] sm:%s187]
        %197 = vst [vmem:[%s195] sm:%s187] %v196
      $region104: #{_forward.1} parent=98 // loop_footer
        %s193 = sadd.s32 1, %s189
      $region105: #{_forward.1} parent=98 // loop_footer_branch
        %188 = sbr.rel target = $region101
      $region106: #{_forward.1} parent=98 // loop_exit
        _
    $region99: #{_forward.1} parent=1 // pred_fallthru
      _
    // Predicated region
    $region118: #{_forward.1} parent=1 // pred_check
      _
    $region119: #{_forward.1} parent=1 // pred_check_branch
      %221 = sbr.rel (0) target = $region121
    $region120: #{_forward.1} parent=1 // pred_region
      %222 = vsyncadd %s178, 16
    $region121: #{_forward.1} parent=1 // pred_fallthru
      _
    %s223 = sld [smem:[#allocation5 + $0x2]]
    %s224 = smul.addr %s223, 16
    %s225 = scalar_lea.hbm %s2, %s224
    %s226 = scalar_lea.vmem [#allocation2], 2
    %s227 = scalar_lea.sflag [#allocation4], 2
    // Predicated region
    $region122: #{_forward.1} parent=1 // pred_check
      _
    $region123: #{_forward.1} parent=1 // pred_check_branch
      %229 = sbr.rel target = $region125
    $region124: #{_forward.1} parent=1 // pred_region
      %230 = sst [smem:[#allocation16]] [#allocation23]
      %231 = sst [smem:[#allocation17]] [#allocation22]
    $region125: #{_forward.1} parent=1 // pred_fallthru
      _
    %233 = shalt.err (0)
    %s235 = sshll.u32 %s226, 4
    %s236 = int_to_ptr.vmem [resolvable:$true] %s235
    %238 = dma.hbm_to_vmem [thread:$0]  %s225, 16, %s236, %s227
    %s239 = sld [smem:[#allocation8 + $0x2]]
    %s240 = scalar_lea.vmem %s3, %s239
    %s241 = scalar_lea.vmem [#allocation3], 2
    %s242 = scalar_lea.sflag [#allocation4], 10
    %p244 = scmp.lt.u32.totalorder 1, 8
    %p245 = pneg %p244
    // Predicated region
    $region126: #{_forward.1} parent=1 // pred_check
      _
    $region127: #{_forward.1} parent=1 // pred_check_branch
      %247 = sbr.rel (%p244) target = $region129
    $region128: #{_forward.1} parent=1 // pred_region
      %s262 = sand.u32 1, 7
      %p263 = scmp.eq.s32.totalorder %s262, 0
      %p264 = pneg %p263
      // Predicated region
      $region141: #{_forward.1} parent=128 // pred_check
        _
      $region142: #{_forward.1} parent=128 // pred_check_branch
        %266 = sbr.rel (%p263) target = $region144
      $region143: #{_forward.1} parent=128 // pred_region
        %s267 = sand.u32 1, 7
        %s268 = ssub.s32 1, %s267
        %s269 = scalar_lea.vmem %s240, %s268
        %s270 = ssub.s32 1, %s267
        %s271 = scalar_lea.vmem %s241, %s270 [#allocation3]
        %s272 = sshllo.u32 0, %s267
        loop: start=0, step=1, limit=1
        $region145: #{_forward.1} parent=143 // loop_pre_header
          _
        $region146: #{_forward.1} parent=143 // loop_header
          %s274 = sphi 0, %s278
          %p275 = scmp.ge.s32.totalorder %s274, 1
          %s279 = sphi %s269, %s269
          %s280 = sphi %s271, %s271
        $region147: #{_forward.1} parent=143 // loop_header_branch
          %277 = sbr.rel (%p275) target = $region151
        $region148: #{_forward.1} parent=143 // loop_body
          %v281 = vld [vmem:[%s279] sm:%s272]
          %282 = vst [vmem:[%s280] sm:%s272] %v281
        $region149: #{_forward.1} parent=143 // loop_footer
          %s278 = sadd.s32 1, %s274
        $region150: #{_forward.1} parent=143 // loop_footer_branch
          %273 = sbr.rel target = $region146
        $region151: #{_forward.1} parent=143 // loop_exit
          _
      $region144: #{_forward.1} parent=128 // pred_fallthru
        _
    $region129: #{_forward.1} parent=1 // pred_fallthru
      _
    // Predicated region
    $region130: #{_forward.1} parent=1 // pred_check
      %p248 = pneg %p244
    $region131: #{_forward.1} parent=1 // pred_check_branch
      %250 = sbr.rel (%p248) target = $region133
    $region132: #{_forward.1} parent=1 // pred_region
      %s251 = sshllo.u32 0, 1
      loop: start=0, step=1, limit=1
      $region134: #{_forward.1} parent=132 // loop_pre_header
        _
      $region135: #{_forward.1} parent=132 // loop_header
        %s253 = sphi 0, %s257
        %p254 = scmp.ge.s32.totalorder %s253, 1
        %s258 = sphi %s240, %s240
        %s259 = sphi %s241, %s241
      $region136: #{_forward.1} parent=132 // loop_header_branch
        %256 = sbr.rel (%p254) target = $region140
      $region137: #{_forward.1} parent=132 // loop_body
        %v260 = vld [vmem:[%s258] sm:%s251]
        %261 = vst [vmem:[%s259] sm:%s251] %v260
      $region138: #{_forward.1} parent=132 // loop_footer
        %s257 = sadd.s32 1, %s253
      $region139: #{_forward.1} parent=132 // loop_footer_branch
        %252 = sbr.rel target = $region135
      $region140: #{_forward.1} parent=132 // loop_exit
        _
    $region133: #{_forward.1} parent=1 // pred_fallthru
      _
    // Predicated region
    $region152: #{_forward.1} parent=1 // pred_check
      _
    $region153: #{_forward.1} parent=1 // pred_check_branch
      %285 = sbr.rel (0) target = $region155
    $region154: #{_forward.1} parent=1 // pred_region
      %286 = vsyncadd %s242, 16
    $region155: #{_forward.1} parent=1 // pred_fallthru
      _
    %s287 = sld [smem:[#allocation5 + $0x3]]
    %s288 = smul.addr %s287, 16
    %s289 = scalar_lea.hbm %s2, %s288
    %s290 = scalar_lea.vmem [#allocation2], 3
    %s291 = scalar_lea.sflag [#allocation4], 3
    // Predicated region
    $region156: #{_forward.1} parent=1 // pred_check
      _
    $region157: #{_forward.1} parent=1 // pred_check_branch
      %293 = sbr.rel target = $region159
    $region158: #{_forward.1} parent=1 // pred_region
      %294 = sst [smem:[#allocation16]] [#allocation26]
      %295 = sst [smem:[#allocation17]] [#allocation25]
    $region159: #{_forward.1} parent=1 // pred_fallthru
      _
    %297 = shalt.err (0)
    %s299 = sshll.u32 %s290, 4
    %s300 = int_to_ptr.vmem [resolvable:$true] %s299
    %302 = dma.hbm_to_vmem [thread:$0]  %s289, 16, %s300, %s291
    %s303 = sld [smem:[#allocation8 + $0x3]]
    %s304 = scalar_lea.vmem %s3, %s303
    %s305 = scalar_lea.vmem [#allocation3], 3
    %s306 = scalar_lea.sflag [#allocation4], 11
    %p308 = scmp.lt.u32.totalorder 1, 8
    %p309 = pneg %p308
    // Predicated region
    $region160: #{_forward.1} parent=1 // pred_check
      _
    $region161: #{_forward.1} parent=1 // pred_check_branch
      %311 = sbr.rel (%p308) target = $region163
    $region162: #{_forward.1} parent=1 // pred_region
      %s326 = sand.u32 1, 7
      %p327 = scmp.eq.s32.totalorder %s326, 0
      %p328 = pneg %p327
      // Predicated region
      $region175: #{_forward.1} parent=162 // pred_check
        _
      $region176: #{_forward.1} parent=162 // pred_check_branch
        %330 = sbr.rel (%p327) target = $region178
      $region177: #{_forward.1} parent=162 // pred_region
        %s331 = sand.u32 1, 7
        %s332 = ssub.s32 1, %s331
        %s333 = scalar_lea.vmem %s304, %s332
        %s334 = ssub.s32 1, %s331
        %s335 = scalar_lea.vmem %s305, %s334 [#allocation3]
        %s336 = sshllo.u32 0, %s331
        loop: start=0, step=1, limit=1
        $region179: #{_forward.1} parent=177 // loop_pre_header
          _
        $region180: #{_forward.1} parent=177 // loop_header
          %s338 = sphi 0, %s342
          %p339 = scmp.ge.s32.totalorder %s338, 1
          %s343 = sphi %s333, %s333
          %s344 = sphi %s335, %s335
        $region181: #{_forward.1} parent=177 // loop_header_branch
          %341 = sbr.rel (%p339) target = $region185
        $region182: #{_forward.1} parent=177 // loop_body
          %v345 = vld [vmem:[%s343] sm:%s336]
          %346 = vst [vmem:[%s344] sm:%s336] %v345
        $region183: #{_forward.1} parent=177 // loop_footer
          %s342 = sadd.s32 1, %s338
        $region184: #{_forward.1} parent=177 // loop_footer_branch
          %337 = sbr.rel target = $region180
        $region185: #{_forward.1} parent=177 // loop_exit
          _
      $region178: #{_forward.1} parent=162 // pred_fallthru
        _
    $region163: #{_forward.1} parent=1 // pred_fallthru
      _
    // Predicated region
    $region164: #{_forward.1} parent=1 // pred_check
      %p312 = pneg %p308
    $region165: #{_forward.1} parent=1 // pred_check_branch
      %314 = sbr.rel (%p312) target = $region167
    $region166: #{_forward.1} parent=1 // pred_region
      %s315 = sshllo.u32 0, 1
      loop: start=0, step=1, limit=1
      $region168: #{_forward.1} parent=166 // loop_pre_header
        _
      $region169: #{_forward.1} parent=166 // loop_header
        %s317 = sphi 0, %s321
        %p318 = scmp.ge.s32.totalorder %s317, 1
        %s322 = sphi %s304, %s304
        %s323 = sphi %s305, %s305
      $region170: #{_forward.1} parent=166 // loop_header_branch
        %320 = sbr.rel (%p318) target = $region174
      $region171: #{_forward.1} parent=166 // loop_body
        %v324 = vld [vmem:[%s322] sm:%s315]
        %325 = vst [vmem:[%s323] sm:%s315] %v324
      $region172: #{_forward.1} parent=166 // loop_footer
        %s321 = sadd.s32 1, %s317
      $region173: #{_forward.1} parent=166 // loop_footer_branch
        %316 = sbr.rel target = $region169
      $region174: #{_forward.1} parent=166 // loop_exit
        _
    $region167: #{_forward.1} parent=1 // pred_fallthru
      _
    // Predicated region
    $region186: #{_forward.1} parent=1 // pred_check
      _
    $region187: #{_forward.1} parent=1 // pred_check_branch
      %349 = sbr.rel (0) target = $region189
    $region188: #{_forward.1} parent=1 // pred_region
      %350 = vsyncadd %s306, 16
    $region189: #{_forward.1} parent=1 // pred_fallthru
      _
    %s351 = sld [smem:[#allocation5 + $0x4]]
    %s352 = smul.addr %s351, 16
    %s353 = scalar_lea.hbm %s2, %s352
    %s354 = scalar_lea.vmem [#allocation2], 4
    %s355 = scalar_lea.sflag [#allocation4], 4
    // Predicated region
    $region190: #{_forward.1} parent=1 // pred_check
      _
    $region191: #{_forward.1} parent=1 // pred_check_branch
      %357 = sbr.rel target = $region193
    $region192: #{_forward.1} parent=1 // pred_region
      %358 = sst [smem:[#allocation16]] [#allocation29]
      %359 = sst [smem:[#allocation17]] [#allocation28]
    $region193: #{_forward.1} parent=1 // pred_fallthru
      _
    %361 = shalt.err (0)
    %s363 = sshll.u32 %s354, 4
    %s364 = int_to_ptr.vmem [resolvable:$true] %s363
    %366 = dma.hbm_to_vmem [thread:$0]  %s353, 16, %s364, %s355
    %s367 = sld [smem:[#allocation8 + $0x4]]
    %s368 = scalar_lea.vmem %s3, %s367
    %s369 = scalar_lea.vmem [#allocation3], 4
    %s370 = scalar_lea.sflag [#allocation4], 12
    %p372 = scmp.lt.u32.totalorder 1, 8
    %p373 = pneg %p372
    // Predicated region
    $region194: #{_forward.1} parent=1 // pred_check
      _
    $region195: #{_forward.1} parent=1 // pred_check_branch
      %375 = sbr.rel (%p372) target = $region197
    $region196: #{_forward.1} parent=1 // pred_region
      %s390 = sand.u32 1, 7
      %p391 = scmp.eq.s32.totalorder %s390, 0
      %p392 = pneg %p391
      // Predicated region
      $region209: #{_forward.1} parent=196 // pred_check
        _
      $region210: #{_forward.1} parent=196 // pred_check_branch
        %394 = sbr.rel (%p391) target = $region212
      $region211: #{_forward.1} parent=196 // pred_region
        %s395 = sand.u32 1, 7
        %s396 = ssub.s32 1, %s395
        %s397 = scalar_lea.vmem %s368, %s396
        %s398 = ssub.s32 1, %s395
        %s399 = scalar_lea.vmem %s369, %s398 [#allocation3]
        %s400 = sshllo.u32 0, %s395
        loop: start=0, step=1, limit=1
        $region213: #{_forward.1} parent=211 // loop_pre_header
          _
        $region214: #{_forward.1} parent=211 // loop_header
          %s402 = sphi 0, %s406
          %p403 = scmp.ge.s32.totalorder %s402, 1
          %s407 = sphi %s397, %s397
          %s408 = sphi %s399, %s399
        $region215: #{_forward.1} parent=211 // loop_header_branch
          %405 = sbr.rel (%p403) target = $region219
        $region216: #{_forward.1} parent=211 // loop_body
          %v409 = vld [vmem:[%s407] sm:%s400]
          %410 = vst [vmem:[%s408] sm:%s400] %v409
        $region217: #{_forward.1} parent=211 // loop_footer
          %s406 = sadd.s32 1, %s402
        $region218: #{_forward.1} parent=211 // loop_footer_branch
          %401 = sbr.rel target = $region214
        $region219: #{_forward.1} parent=211 // loop_exit
          _
      $region212: #{_forward.1} parent=196 // pred_fallthru
        _
    $region197: #{_forward.1} parent=1 // pred_fallthru
      _
    // Predicated region
    $region198: #{_forward.1} parent=1 // pred_check
      %p376 = pneg %p372
    $region199: #{_forward.1} parent=1 // pred_check_branch
      %378 = sbr.rel (%p376) target = $region201
    $region200: #{_forward.1} parent=1 // pred_region
      %s379 = sshllo.u32 0, 1
      loop: start=0, step=1, limit=1
      $region202: #{_forward.1} parent=200 // loop_pre_header
        _
      $region203: #{_forward.1} parent=200 // loop_header
        %s381 = sphi 0, %s385
        %p382 = scmp.ge.s32.totalorder %s381, 1
        %s386 = sphi %s368, %s368
        %s387 = sphi %s369, %s369
      $region204: #{_forward.1} parent=200 // loop_header_branch
        %384 = sbr.rel (%p382) target = $region208
      $region205: #{_forward.1} parent=200 // loop_body
        %v388 = vld [vmem:[%s386] sm:%s379]
        %389 = vst [vmem:[%s387] sm:%s379] %v388
      $region206: #{_forward.1} parent=200 // loop_footer
        %s385 = sadd.s32 1, %s381
      $region207: #{_forward.1} parent=200 // loop_footer_branch
        %380 = sbr.rel target = $region203
      $region208: #{_forward.1} parent=200 // loop_exit
        _
    $region201: #{_forward.1} parent=1 // pred_fallthru
      _
    // Predicated region
    $region220: #{_forward.1} parent=1 // pred_check
      _
    $region221: #{_forward.1} parent=1 // pred_check_branch
      %413 = sbr.rel (0) target = $region223
    $region222: #{_forward.1} parent=1 // pred_region
      %414 = vsyncadd %s370, 16
    $region223: #{_forward.1} parent=1 // pred_fallthru
      _
    %s415 = sld [smem:[#allocation5 + $0x5]]
    %s416 = smul.addr %s415, 16
    %s417 = scalar_lea.hbm %s2, %s416
    %s418 = scalar_lea.vmem [#allocation2], 5
    %s419 = scalar_lea.sflag [#allocation4], 5
    // Predicated region
    $region224: #{_forward.1} parent=1 // pred_check
      _
    $region225: #{_forward.1} parent=1 // pred_check_branch
      %421 = sbr.rel target = $region227
    $region226: #{_forward.1} parent=1 // pred_region
      %422 = sst [smem:[#allocation16]] [#allocation32]
      %423 = sst [smem:[#allocation17]] [#allocation31]
    $region227: #{_forward.1} parent=1 // pred_fallthru
      _
    %425 = shalt.err (0)
    %s427 = sshll.u32 %s418, 4
    %s428 = int_to_ptr.vmem [resolvable:$true] %s427
    %430 = dma.hbm_to_vmem [thread:$0]  %s417, 16, %s428, %s419
    %s431 = sld [smem:[#allocation8 + $0x5]]
    %s432 = scalar_lea.vmem %s3, %s431
    %s433 = scalar_lea.vmem [#allocation3], 5
    %s434 = scalar_lea.sflag [#allocation4], 13
    %p436 = scmp.lt.u32.totalorder 1, 8
    %p437 = pneg %p436
    // Predicated region
    $region228: #{_forward.1} parent=1 // pred_check
      _
    $region229: #{_forward.1} parent=1 // pred_check_branch
      %439 = sbr.rel (%p436) target = $region231
    $region230: #{_forward.1} parent=1 // pred_region
      %s454 = sand.u32 1, 7
      %p455 = scmp.eq.s32.totalorder %s454, 0
      %p456 = pneg %p455
      // Predicated region
      $region243: #{_forward.1} parent=230 // pred_check
        _
      $region244: #{_forward.1} parent=230 // pred_check_branch
        %458 = sbr.rel (%p455) target = $region246
      $region245: #{_forward.1} parent=230 // pred_region
        %s459 = sand.u32 1, 7
        %s460 = ssub.s32 1, %s459
        %s461 = scalar_lea.vmem %s432, %s460
        %s462 = ssub.s32 1, %s459
        %s463 = scalar_lea.vmem %s433, %s462 [#allocation3]
        %s464 = sshllo.u32 0, %s459
        loop: start=0, step=1, limit=1
        $region247: #{_forward.1} parent=245 // loop_pre_header
          _
        $region248: #{_forward.1} parent=245 // loop_header
          %s466 = sphi 0, %s470
          %p467 = scmp.ge.s32.totalorder %s466, 1
          %s471 = sphi %s461, %s461
          %s472 = sphi %s463, %s463
        $region249: #{_forward.1} parent=245 // loop_header_branch
          %469 = sbr.rel (%p467) target = $region253
        $region250: #{_forward.1} parent=245 // loop_body
          %v473 = vld [vmem:[%s471] sm:%s464]
          %474 = vst [vmem:[%s472] sm:%s464] %v473
        $region251: #{_forward.1} parent=245 // loop_footer
          %s470 = sadd.s32 1, %s466
        $region252: #{_forward.1} parent=245 // loop_footer_branch
          %465 = sbr.rel target = $region248
        $region253: #{_forward.1} parent=245 // loop_exit
          _
      $region246: #{_forward.1} parent=230 // pred_fallthru
        _
    $region231: #{_forward.1} parent=1 // pred_fallthru
      _
    // Predicated region
    $region232: #{_forward.1} parent=1 // pred_check
      %p440 = pneg %p436
    $region233: #{_forward.1} parent=1 // pred_check_branch
      %442 = sbr.rel (%p440) target = $region235
    $region234: #{_forward.1} parent=1 // pred_region
      %s443 = sshllo.u32 0, 1
      loop: start=0, step=1, limit=1
      $region236: #{_forward.1} parent=234 // loop_pre_header
        _
      $region237: #{_forward.1} parent=234 // loop_header
        %s445 = sphi 0, %s449
        %p446 = scmp.ge.s32.totalorder %s445, 1
        %s450 = sphi %s432, %s432
        %s451 = sphi %s433, %s433
      $region238: #{_forward.1} parent=234 // loop_header_branch
        %448 = sbr.rel (%p446) target = $region242
      $region239: #{_forward.1} parent=234 // loop_body
        %v452 = vld [vmem:[%s450] sm:%s443]
        %453 = vst [vmem:[%s451] sm:%s443] %v452
      $region240: #{_forward.1} parent=234 // loop_footer
        %s449 = sadd.s32 1, %s445
      $region241: #{_forward.1} parent=234 // loop_footer_branch
        %444 = sbr.rel target = $region237
      $region242: #{_forward.1} parent=234 // loop_exit
        _
    $region235: #{_forward.1} parent=1 // pred_fallthru
      _
    // Predicated region
    $region254: #{_forward.1} parent=1 // pred_check
      _
    $region255: #{_forward.1} parent=1 // pred_check_branch
      %477 = sbr.rel (0) target = $region257
    $region256: #{_forward.1} parent=1 // pred_region
      %478 = vsyncadd %s434, 16
    $region257: #{_forward.1} parent=1 // pred_fallthru
      _
    %s479 = sld [smem:[#allocation5 + $0x6]]
    %s480 = smul.addr %s479, 16
    %s481 = scalar_lea.hbm %s2, %s480
    %s482 = scalar_lea.vmem [#allocation2], 6
    %s483 = scalar_lea.sflag [#allocation4], 6
    // Predicated region
    $region258: #{_forward.1} parent=1 // pred_check
      _
    $region259: #{_forward.1} parent=1 // pred_check_branch
      %485 = sbr.rel target = $region261
    $region260: #{_forward.1} parent=1 // pred_region
      %486 = sst [smem:[#allocation16]] [#allocation35]
      %487 = sst [smem:[#allocation17]] [#allocation34]
    $region261: #{_forward.1} parent=1 // pred_fallthru
      _
    %489 = shalt.err (0)
    %s491 = sshll.u32 %s482, 4
    %s492 = int_to_ptr.vmem [resolvable:$true] %s491
    %494 = dma.hbm_to_vmem [thread:$0]  %s481, 16, %s492, %s483
    %s495 = sld [smem:[#allocation8 + $0x6]]
    %s496 = scalar_lea.vmem %s3, %s495
    %s497 = scalar_lea.vmem [#allocation3], 6
    %s498 = scalar_lea.sflag [#allocation4], 14
    %p500 = scmp.lt.u32.totalorder 1, 8
    %p501 = pneg %p500
    // Predicated region
    $region262: #{_forward.1} parent=1 // pred_check
      _
    $region263: #{_forward.1} parent=1 // pred_check_branch
      %503 = sbr.rel (%p500) target = $region265
    $region264: #{_forward.1} parent=1 // pred_region
      %s518 = sand.u32 1, 7
      %p519 = scmp.eq.s32.totalorder %s518, 0
      %p520 = pneg %p519
      // Predicated region
      $region277: #{_forward.1} parent=264 // pred_check
        _
      $region278: #{_forward.1} parent=264 // pred_check_branch
        %522 = sbr.rel (%p519) target = $region280
      $region279: #{_forward.1} parent=264 // pred_region
        %s523 = sand.u32 1, 7
        %s524 = ssub.s32 1, %s523
        %s525 = scalar_lea.vmem %s496, %s524
        %s526 = ssub.s32 1, %s523
        %s527 = scalar_lea.vmem %s497, %s526 [#allocation3]
        %s528 = sshllo.u32 0, %s523
        loop: start=0, step=1, limit=1
        $region281: #{_forward.1} parent=279 // loop_pre_header
          _
        $region282: #{_forward.1} parent=279 // loop_header
          %s530 = sphi 0, %s534
          %p531 = scmp.ge.s32.totalorder %s530, 1
          %s535 = sphi %s525, %s525
          %s536 = sphi %s527, %s527
        $region283: #{_forward.1} parent=279 // loop_header_branch
          %533 = sbr.rel (%p531) target = $region287
        $region284: #{_forward.1} parent=279 // loop_body
          %v537 = vld [vmem:[%s535] sm:%s528]
          %538 = vst [vmem:[%s536] sm:%s528] %v537
        $region285: #{_forward.1} parent=279 // loop_footer
          %s534 = sadd.s32 1, %s530
        $region286: #{_forward.1} parent=279 // loop_footer_branch
          %529 = sbr.rel target = $region282
        $region287: #{_forward.1} parent=279 // loop_exit
          _
      $region280: #{_forward.1} parent=264 // pred_fallthru
        _
    $region265: #{_forward.1} parent=1 // pred_fallthru
      _
    // Predicated region
    $region266: #{_forward.1} parent=1 // pred_check
      %p504 = pneg %p500
    $region267: #{_forward.1} parent=1 // pred_check_branch
      %506 = sbr.rel (%p504) target = $region269
    $region268: #{_forward.1} parent=1 // pred_region
      %s507 = sshllo.u32 0, 1
      loop: start=0, step=1, limit=1
      $region270: #{_forward.1} parent=268 // loop_pre_header
        _
      $region271: #{_forward.1} parent=268 // loop_header
        %s509 = sphi 0, %s513
        %p510 = scmp.ge.s32.totalorder %s509, 1
        %s514 = sphi %s496, %s496
        %s515 = sphi %s497, %s497
      $region272: #{_forward.1} parent=268 // loop_header_branch
        %512 = sbr.rel (%p510) target = $region276
      $region273: #{_forward.1} parent=268 // loop_body
        %v516 = vld [vmem:[%s514] sm:%s507]
        %517 = vst [vmem:[%s515] sm:%s507] %v516
      $region274: #{_forward.1} parent=268 // loop_footer
        %s513 = sadd.s32 1, %s509
      $region275: #{_forward.1} parent=268 // loop_footer_branch
        %508 = sbr.rel target = $region271
      $region276: #{_forward.1} parent=268 // loop_exit
        _
    $region269: #{_forward.1} parent=1 // pred_fallthru
      _
    // Predicated region
    $region288: #{_forward.1} parent=1 // pred_check
      _
    $region289: #{_forward.1} parent=1 // pred_check_branch
      %541 = sbr.rel (0) target = $region291
    $region290: #{_forward.1} parent=1 // pred_region
      %542 = vsyncadd %s498, 16
    $region291: #{_forward.1} parent=1 // pred_fallthru
      _
    %s543 = sld [smem:[#allocation5 + $0x7]]
    %s544 = smul.addr %s543, 16
    %s545 = scalar_lea.hbm %s2, %s544
    %s546 = scalar_lea.vmem [#allocation2], 7
    %s547 = scalar_lea.sflag [#allocation4], 7
    // Predicated region
    $region292: #{_forward.1} parent=1 // pred_check
      _
    $region293: #{_forward.1} parent=1 // pred_check_branch
      %549 = sbr.rel target = $region295
    $region294: #{_forward.1} parent=1 // pred_region
      %550 = sst [smem:[#allocation16]] [#allocation38]
      %551 = sst [smem:[#allocation17]] [#allocation37]
    $region295: #{_forward.1} parent=1 // pred_fallthru
      _
    %553 = shalt.err (0)
    %s555 = sshll.u32 %s546, 4
    %s556 = int_to_ptr.vmem [resolvable:$true] %s555
    %558 = dma.hbm_to_vmem [thread:$0]  %s545, 16, %s556, %s547
    %s559 = sld [smem:[#allocation8 + $0x7]]
    %s560 = scalar_lea.vmem %s3, %s559
    %s561 = scalar_lea.vmem [#allocation3], 7
    %s562 = scalar_lea.sflag [#allocation4], 15
    %p564 = scmp.lt.u32.totalorder 1, 8
    %p565 = pneg %p564
    // Predicated region
    $region296: #{_forward.1} parent=1 // pred_check
      _
    $region297: #{_forward.1} parent=1 // pred_check_branch
      %567 = sbr.rel (%p564) target = $region299
    $region298: #{_forward.1} parent=1 // pred_region
      %s582 = sand.u32 1, 7
      %p583 = scmp.eq.s32.totalorder %s582, 0
      %p584 = pneg %p583
      // Predicated region
      $region311: #{_forward.1} parent=298 // pred_check
        _
      $region312: #{_forward.1} parent=298 // pred_check_branch
        %586 = sbr.rel (%p583) target = $region314
      $region313: #{_forward.1} parent=298 // pred_region
        %s587 = sand.u32 1, 7
        %s588 = ssub.s32 1, %s587
        %s589 = scalar_lea.vmem %s560, %s588
        %s590 = ssub.s32 1, %s587
        %s591 = scalar_lea.vmem %s561, %s590 [#allocation3]
        %s592 = sshllo.u32 0, %s587
        loop: start=0, step=1, limit=1
        $region315: #{_forward.1} parent=313 // loop_pre_header
          _
        $region316: #{_forward.1} parent=313 // loop_header
          %s594 = sphi 0, %s598
          %p595 = scmp.ge.s32.totalorder %s594, 1
          %s599 = sphi %s589, %s589
          %s600 = sphi %s591, %s591
        $region317: #{_forward.1} parent=313 // loop_header_branch
          %597 = sbr.rel (%p595) target = $region321
        $region318: #{_forward.1} parent=313 // loop_body
          %v601 = vld [vmem:[%s599] sm:%s592]
          %602 = vst [vmem:[%s600] sm:%s592] %v601
        $region319: #{_forward.1} parent=313 // loop_footer
          %s598 = sadd.s32 1, %s594
        $region320: #{_forward.1} parent=313 // loop_footer_branch
          %593 = sbr.rel target = $region316
        $region321: #{_forward.1} parent=313 // loop_exit
          _
      $region314: #{_forward.1} parent=298 // pred_fallthru
        _
    $region299: #{_forward.1} parent=1 // pred_fallthru
      _
    // Predicated region
    $region300: #{_forward.1} parent=1 // pred_check
      %p568 = pneg %p564
    $region301: #{_forward.1} parent=1 // pred_check_branch
      %570 = sbr.rel (%p568) target = $region303
    $region302: #{_forward.1} parent=1 // pred_region
      %s571 = sshllo.u32 0, 1
      loop: start=0, step=1, limit=1
      $region304: #{_forward.1} parent=302 // loop_pre_header
        _
      $region305: #{_forward.1} parent=302 // loop_header
        %s573 = sphi 0, %s577
        %p574 = scmp.ge.s32.totalorder %s573, 1
        %s578 = sphi %s560, %s560
        %s579 = sphi %s561, %s561
      $region306: #{_forward.1} parent=302 // loop_header_branch
        %576 = sbr.rel (%p574) target = $region310
      $region307: #{_forward.1} parent=302 // loop_body
        %v580 = vld [vmem:[%s578] sm:%s571]
        %581 = vst [vmem:[%s579] sm:%s571] %v580
      $region308: #{_forward.1} parent=302 // loop_footer
        %s577 = sadd.s32 1, %s573
      $region309: #{_forward.1} parent=302 // loop_footer_branch
        %572 = sbr.rel target = $region305
      $region310: #{_forward.1} parent=302 // loop_exit
        _
    $region303: #{_forward.1} parent=1 // pred_fallthru
      _
    // Predicated region
    $region322: #{_forward.1} parent=1 // pred_check
      _
    $region323: #{_forward.1} parent=1 // pred_check_branch
      %605 = sbr.rel (0) target = $region325
    $region324: #{_forward.1} parent=1 // pred_region
      %606 = vsyncadd %s562, 16
    $region325: #{_forward.1} parent=1 // pred_fallthru
      _
    %s607 = sld [smem:[#allocation5]]
    %s608 = smul.u32 1, 1
    %s609 = sshll.u32 %s608, 4
    %610 = dma.done [#allocation4], %s609
    %s611 = sld [smem:[#allocation8]]
    %s612 = sshll.u32 %s608, 4
    %613 = dma.done %s114, %s612
    %s614 = sld [smem:[#allocation5 + $0x1]]
    %s615 = sshll.u32 %s608, 4
    %616 = dma.done %s163, %s615
    %s617 = sld [smem:[#allocation8 + $0x1]]
    %s618 = sshll.u32 %s608, 4
    %619 = dma.done %s178, %s618
    %s620 = sld [smem:[#allocation5 + $0x2]]
    %s621 = sshll.u32 %s608, 4
    %622 = dma.done %s227, %s621
    %s623 = sld [smem:[#allocation8 + $0x2]]
    %s624 = sshll.u32 %s608, 4
    %625 = dma.done %s242, %s624
    %s626 = sld [smem:[#allocation5 + $0x3]]
    %s627 = sshll.u32 %s608, 4
    %628 = dma.done %s291, %s627
    %s629 = sld [smem:[#allocation8 + $0x3]]
    %s630 = sshll.u32 %s608, 4
    %631 = dma.done %s306, %s630
    %s632 = sld [smem:[#allocation5 + $0x4]]
    %s633 = sshll.u32 %s608, 4
    %634 = dma.done %s355, %s633
    %s635 = sld [smem:[#allocation8 + $0x4]]
    %s636 = sshll.u32 %s608, 4
    %637 = dma.done %s370, %s636
    %s638 = sld [smem:[#allocation5 + $0x5]]
    %s639 = sshll.u32 %s608, 4
    %640 = dma.done %s419, %s639
    %s641 = sld [smem:[#allocation8 + $0x5]]
    %s642 = sshll.u32 %s608, 4
    %643 = dma.done %s434, %s642
    %s644 = sld [smem:[#allocation5 + $0x6]]
    %s645 = sshll.u32 %s608, 4
    %646 = dma.done %s483, %s645
    %s647 = sld [smem:[#allocation8 + $0x6]]
    %s648 = sshll.u32 %s608, 4
    %649 = dma.done %s498, %s648
    %s650 = sld [smem:[#allocation5 + $0x7]]
    %s651 = sshll.u32 %s608, 4
    %652 = dma.done %s547, %s651
    %s653 = sld [smem:[#allocation8 + $0x7]]
    %s654 = sshll.u32 %s608, 4
    %655 = dma.done %s562, %s654
    %v656 = vld [vmem:[#allocation2] sm:$0xff]
    %v657 = vld [vmem:[#allocation3] sm:$0xff]
    %v658 = vadd.f32 %v656, %v657
    %v659 = vpack.c.bf16 %v658, %v658
    %v660 = vld [vmem:[#allocation10] sm:$0xf]
    %v661 = vld [vmem:[#allocation10 + $0x4] sm:$0xf]
    %v662 = vld [vmem:[#allocation10 + $0x8] sm:$0xf]
    %v663 = vld [vmem:[#allocation10 + $0xc] sm:$0xf]
    %v664 = vld [vmem:[#allocation10 + $0x10] sm:$0xf]
    %v665 = vld [vmem:[#allocation10 + $0x14] sm:$0xf]
    %v666 = vld [vmem:[#allocation10 + $0x18] sm:$0xf]
    %v667 = vld [vmem:[#allocation10 + $0x1c] sm:$0xf]
    %v668 = vld [vmem:[#allocation10 + $0x20] sm:$0xf]
    %v669 = vld [vmem:[#allocation10 + $0x24] sm:$0xf]
    %v670 = vld [vmem:[#allocation10 + $0x28] sm:$0xf]
    %v671 = vld [vmem:[#allocation10 + $0x2c] sm:$0xf]
    %v672 = vld [vmem:[#allocation10 + $0x30] sm:$0xf]
    %v673 = vld [vmem:[#allocation10 + $0x34] sm:$0xf]
    %v674 = vld [vmem:[#allocation10 + $0x38] sm:$0xf]
    %v675 = vld [vmem:[#allocation10 + $0x3c] sm:$0xf]
    %v676 = vld [vmem:[%s5] sm:$0x1]
    %v678 = vlaneseq
    %v679 = vshrl.u32 %v678, 7
    %v680 = vsub.s32 0, %v679
    %v681 = vrot.slane %v676, %v680
    %v699 = vunpack.c.l.b16 %v660
    %v700 = vunpack.c.l.b16 %v661
    %v701 = vunpack.c.l.b16 %v662
    %v702 = vunpack.c.l.b16 %v663
    %v703 = vunpack.c.l.b16 %v664
    %v704 = vunpack.c.l.b16 %v665
    %v705 = vunpack.c.l.b16 %v666
    %v706 = vunpack.c.l.b16 %v667
    %v707 = vunpack.c.l.b16 %v668
    %v708 = vunpack.c.l.b16 %v669
    %v709 = vunpack.c.l.b16 %v670
    %v710 = vunpack.c.l.b16 %v671
    %v711 = vunpack.c.l.b16 %v672
    %v712 = vunpack.c.l.b16 %v673
    %v713 = vunpack.c.l.b16 %v674
    %v714 = vunpack.c.l.b16 %v675
    %v715 = vpack.c.b16 %v700, %v699
    %v716 = vpack.c.b16 %v702, %v701
    %v717 = vpack.c.b16 %v704, %v703
    %v718 = vpack.c.b16 %v706, %v705
    %v719 = vpack.c.b16 %v708, %v707
    %v720 = vpack.c.b16 %v710, %v709
    %v721 = vpack.c.b16 %v712, %v711
    %v722 = vpack.c.b16 %v714, %v713
    %731 = vmatprep.subr.bf16.mxu0 0
    %732 = vmatpush1.bf16.msra.mxu0 %v715
    %733 = vmatprep.subr.bf16.mxu0 0
    %734 = vmatpush1.bf16.msra.mxu0 %v716
    %735 = vmatprep.subr.bf16.mxu0 0
    %736 = vmatpush1.bf16.msra.mxu0 %v717
    %737 = vmatprep.subr.bf16.mxu0 0
    %738 = vmatpush1.bf16.msra.mxu0 %v718
    %739 = vmatprep.subr.bf16.mxu0 0
    %740 = vmatpush1.bf16.msra.mxu0 %v719
    %741 = vmatprep.subr.bf16.mxu0 0
    %742 = vmatpush1.bf16.msra.mxu0 %v720
    %743 = vmatprep.subr.bf16.mxu0 0
    %744 = vmatpush1.bf16.msra.mxu0 %v721
    %745 = vmatprep.subr.bf16.mxu0 0
    %746 = vmatpush1.bf16.msra.mxu0 %v722
    %747 = vmatprep.subr.bf16.mxu0 0
    %748 = vmatpush1.bf16.msra.mxu0 0
    %749 = vmatprep.subr.bf16.mxu0 0
    %750 = vmatpush1.bf16.msra.mxu0 0
    %751 = vmatprep.subr.bf16.mxu0 0
    %752 = vmatpush1.bf16.msra.mxu0 0
    %753 = vmatprep.subr.bf16.mxu0 0
    %754 = vmatpush1.bf16.msra.mxu0 0
    %755 = vmatprep.subr.bf16.mxu0 0
    %756 = vmatpush1.bf16.msra.mxu0 0
    %757 = vmatprep.subr.bf16.mxu0 0
    %758 = vmatpush1.bf16.msra.mxu0 0
    %759 = vmatprep.subr.bf16.mxu0 0
    %760 = vmatpush1.bf16.msra.mxu0 0
    %761 = vmatprep.subr.bf16.mxu0 0
    %762 = vmatpush1.bf16.msra.mxu0 0
    %763 = vmatprep.mubr.bf16.mxu0 0
    %764 = vmatmul.mubr.bf16.gmra.mrb[0].mxu0 %v659
    %v765 = vpop.f32.mrb[0].mxu0
    %v766 = vadd.f32 %v681, %v765
    %v767 = vpop.f32.mrb[0].mxu0
    %v768 = vpop.f32.mrb[0].mxu0
    %v769 = vpop.f32.mrb[0].mxu0
    %770 = vdwg.mxu0
    %v771 = vtanh.pop %v766
    %v772 = vpack.c.bf16 %v771, %v771
    %v773 = vld [vmem:[#allocation11] sm:$0xf]
    %v774 = vld [vmem:[#allocation11 + $0x4] sm:$0xf]
    %v775 = vld [vmem:[#allocation11 + $0x8] sm:$0xf]
    %v776 = vld [vmem:[#allocation11 + $0xc] sm:$0xf]
    %v777 = vld [vmem:[#allocation11 + $0x10] sm:$0xf]
    %v778 = vld [vmem:[#allocation11 + $0x14] sm:$0xf]
    %v779 = vld [vmem:[#allocation11 + $0x18] sm:$0xf]
    %v780 = vld [vmem:[#allocation11 + $0x1c] sm:$0xf]
    %v781 = vld [vmem:[#allocation11 + $0x20] sm:$0xf]
    %v782 = vld [vmem:[#allocation11 + $0x24] sm:$0xf]
    %v783 = vld [vmem:[#allocation11 + $0x28] sm:$0xf]
    %v784 = vld [vmem:[#allocation11 + $0x2c] sm:$0xf]
    %v785 = vld [vmem:[#allocation11 + $0x30] sm:$0xf]
    %v786 = vld [vmem:[#allocation11 + $0x34] sm:$0xf]
    %v787 = vld [vmem:[#allocation11 + $0x38] sm:$0xf]
    %v788 = vld [vmem:[#allocation11 + $0x3c] sm:$0xf]
    %v789 = vld [vmem:[%s7] sm:$0x1]
    %v791 = vlaneseq
    %v792 = vshrl.u32 %v791, 7
    %v793 = vsub.s32 0, %v792
    %v794 = vrot.slane %v789, %v793
    %v812 = vunpack.c.l.b16 %v773
    %v813 = vunpack.c.l.b16 %v774
    %v814 = vunpack.c.l.b16 %v775
    %v815 = vunpack.c.l.b16 %v776
    %v816 = vunpack.c.l.b16 %v777
    %v817 = vunpack.c.l.b16 %v778
    %v818 = vunpack.c.l.b16 %v779
    %v819 = vunpack.c.l.b16 %v780
    %v820 = vunpack.c.l.b16 %v781
    %v821 = vunpack.c.l.b16 %v782
    %v822 = vunpack.c.l.b16 %v783
    %v823 = vunpack.c.l.b16 %v784
    %v824 = vunpack.c.l.b16 %v785
    %v825 = vunpack.c.l.b16 %v786
    %v826 = vunpack.c.l.b16 %v787
    %v827 = vunpack.c.l.b16 %v788
    %v828 = vpack.c.b16 %v813, %v812
    %v829 = vpack.c.b16 %v815, %v814
    %v830 = vpack.c.b16 %v817, %v816
    %v831 = vpack.c.b16 %v819, %v818
    %v832 = vpack.c.b16 %v821, %v820
    %v833 = vpack.c.b16 %v823, %v822
    %v834 = vpack.c.b16 %v825, %v824
    %v835 = vpack.c.b16 %v827, %v826
    %844 = vmatprep.subr.bf16.mxu0 0
    %845 = vmatpush1.bf16.msra.mxu0 %v828
    %846 = vmatprep.subr.bf16.mxu0 0
    %847 = vmatpush1.bf16.msra.mxu0 %v829
    %848 = vmatprep.subr.bf16.mxu0 0
    %849 = vmatpush1.bf16.msra.mxu0 %v830
    %850 = vmatprep.subr.bf16.mxu0 0
    %851 = vmatpush1.bf16.msra.mxu0 %v831
    %852 = vmatprep.subr.bf16.mxu0 0
    %853 = vmatpush1.bf16.msra.mxu0 %v832
    %854 = vmatprep.subr.bf16.mxu0 0
    %855 = vmatpush1.bf16.msra.mxu0 %v833
    %856 = vmatprep.subr.bf16.mxu0 0
    %857 = vmatpush1.bf16.msra.mxu0 %v834
    %858 = vmatprep.subr.bf16.mxu0 0
    %859 = vmatpush1.bf16.msra.mxu0 %v835
    %860 = vmatprep.subr.bf16.mxu0 0
    %861 = vmatpush1.bf16.msra.mxu0 0
    %862 = vmatprep.subr.bf16.mxu0 0
    %863 = vmatpush1.bf16.msra.mxu0 0
    %864 = vmatprep.subr.bf16.mxu0 0
    %865 = vmatpush1.bf16.msra.mxu0 0
    %866 = vmatprep.subr.bf16.mxu0 0
    %867 = vmatpush1.bf16.msra.mxu0 0
    %868 = vmatprep.subr.bf16.mxu0 0
    %869 = vmatpush1.bf16.msra.mxu0 0
    %870 = vmatprep.subr.bf16.mxu0 0
    %871 = vmatpush1.bf16.msra.mxu0 0
    %872 = vmatprep.subr.bf16.mxu0 0
    %873 = vmatpush1.bf16.msra.mxu0 0
    %874 = vmatprep.subr.bf16.mxu0 0
    %875 = vmatpush1.bf16.msra.mxu0 0
    %876 = vmatprep.mubr.bf16.mxu0 0
    %877 = vmatmul.mubr.bf16.gmra.mrb[0].mxu0 %v772
    %v878 = vpop.f32.mrb[0].mxu0
    %v879 = vadd.f32 %v794, %v878
    %v880 = vpop.f32.mrb[0].mxu0
    %v881 = vpop.f32.mrb[0].mxu0
    %v882 = vpop.f32.mrb[0].mxu0
    %883 = vdwg.mxu0
    %v884 = vmax.f32 %v879, 0.0
    %v885 = vpack.c.bf16 %v884, %v884
    %v886 = vld [vmem:[#allocation13] sm:$0xf]
    %v887 = vld [vmem:[#allocation13 + $0x4] sm:$0xf]
    %v888 = vld [vmem:[#allocation13 + $0x8] sm:$0xf]
    %v889 = vld [vmem:[#allocation13 + $0xc] sm:$0xf]
    %v890 = vld [vmem:[#allocation13 + $0x10] sm:$0xf]
    %v891 = vld [vmem:[#allocation13 + $0x14] sm:$0xf]
    %v892 = vld [vmem:[#allocation13 + $0x18] sm:$0xf]
    %v893 = vld [vmem:[#allocation13 + $0x1c] sm:$0xf]
    %v894 = vld [vmem:[#allocation13 + $0x20] sm:$0xf]
    %v895 = vld [vmem:[#allocation13 + $0x24] sm:$0xf]
    %v896 = vld [vmem:[#allocation13 + $0x28] sm:$0xf]
    %v897 = vld [vmem:[#allocation13 + $0x2c] sm:$0xf]
    %v898 = vld [vmem:[#allocation13 + $0x30] sm:$0xf]
    %v899 = vld [vmem:[#allocation13 + $0x34] sm:$0xf]
    %v900 = vld [vmem:[#allocation13 + $0x38] sm:$0xf]
    %v901 = vld [vmem:[#allocation13 + $0x3c] sm:$0xf]
    %v902 = vld [vmem:[%s9] sm:$0x1]
    %v904 = vlaneseq
    %v905 = vshrl.u32 %v904, 7
    %v906 = vsub.s32 0, %v905
    %v907 = vrot.slane %v902, %v906
    %v925 = vunpack.c.l.b16 %v886
    %v926 = vunpack.c.l.b16 %v887
    %v927 = vunpack.c.l.b16 %v888
    %v928 = vunpack.c.l.b16 %v889
    %v929 = vunpack.c.l.b16 %v890
    %v930 = vunpack.c.l.b16 %v891
    %v931 = vunpack.c.l.b16 %v892
    %v932 = vunpack.c.l.b16 %v893
    %v933 = vunpack.c.l.b16 %v894
    %v934 = vunpack.c.l.b16 %v895
    %v935 = vunpack.c.l.b16 %v896
    %v936 = vunpack.c.l.b16 %v897
    %v937 = vunpack.c.l.b16 %v898
    %v938 = vunpack.c.l.b16 %v899
    %v939 = vunpack.c.l.b16 %v900
    %v940 = vunpack.c.l.b16 %v901
    %v941 = vpack.c.b16 %v926, %v925
    %v942 = vpack.c.b16 %v928, %v927
    %v943 = vpack.c.b16 %v930, %v929
    %v944 = vpack.c.b16 %v932, %v931
    %v945 = vpack.c.b16 %v934, %v933
    %v946 = vpack.c.b16 %v936, %v935
    %v947 = vpack.c.b16 %v938, %v937
    %v948 = vpack.c.b16 %v940, %v939
    %957 = vmatprep.subr.bf16.mxu0 0
    %958 = vmatpush1.bf16.msra.mxu0 %v941
    %959 = vmatprep.subr.bf16.mxu0 0
    %960 = vmatpush1.bf16.msra.mxu0 %v942
    %961 = vmatprep.subr.bf16.mxu0 0
    %962 = vmatpush1.bf16.msra.mxu0 %v943
    %963 = vmatprep.subr.bf16.mxu0 0
    %964 = vmatpush1.bf16.msra.mxu0 %v944
    %965 = vmatprep.subr.bf16.mxu0 0
    %966 = vmatpush1.bf16.msra.mxu0 %v945
    %967 = vmatprep.subr.bf16.mxu0 0
    %968 = vmatpush1.bf16.msra.mxu0 %v946
    %969 = vmatprep.subr.bf16.mxu0 0
    %970 = vmatpush1.bf16.msra.mxu0 %v947
    %971 = vmatprep.subr.bf16.mxu0 0
    %972 = vmatpush1.bf16.msra.mxu0 %v948
    %973 = vmatprep.subr.bf16.mxu0 0
    %974 = vmatpush1.bf16.msra.mxu0 0
    %975 = vmatprep.subr.bf16.mxu0 0
    %976 = vmatpush1.bf16.msra.mxu0 0
    %977 = vmatprep.subr.bf16.mxu0 0
    %978 = vmatpush1.bf16.msra.mxu0 0
    %979 = vmatprep.subr.bf16.mxu0 0
    %980 = vmatpush1.bf16.msra.mxu0 0
    %981 = vmatprep.subr.bf16.mxu0 0
    %982 = vmatpush1.bf16.msra.mxu0 0
    %983 = vmatprep.subr.bf16.mxu0 0
    %984 = vmatpush1.bf16.msra.mxu0 0
    %985 = vmatprep.subr.bf16.mxu0 0
    %986 = vmatpush1.bf16.msra.mxu0 0
    %987 = vmatprep.subr.bf16.mxu0 0
    %988 = vmatpush1.bf16.msra.mxu0 0
    %989 = vmatprep.mubr.bf16.mxu0 0
    %990 = vmatmul.mubr.bf16.gmra.mrb[0].mxu0 %v885
    %v991 = vpop.f32.mrb[0].mxu0
    %v992 = vadd.f32 %v907, %v991
    %v993 = vpop.f32.mrb[0].mxu0
    %v994 = vpop.f32.mrb[0].mxu0
    %v995 = vpop.f32.mrb[0].mxu0
    %996 = vdwg.mxu0
    %997 = vst [vmem:[%s10] sm:$0xff] %v992
    // Predicated region
    $region326: #{_forward.1} parent=1 // pred_check
      _
    $region327: #{_forward.1} parent=1 // pred_check_branch
      %999 = sbr.rel (0) target = $region329
    $region328: #{_forward.1} parent=1 // pred_region
      _
    $region329: #{_forward.1} parent=1 // pred_fallthru
      _
    // Predicated region
    $region330: #{_forward.1} parent=1 // pred_check
      _
    $region331: #{_forward.1} parent=1 // pred_check_branch
      %1001 = sbr.rel (0) target = $region333
    $region332: #{_forward.1} parent=1 // pred_region
      _
    $region333: #{_forward.1} parent=1 // pred_fallthru
      _
    %1002 = vsyncpa [#allocation6], 1
    %1003 = vsyncpa [#allocation12], 1
    %1004 = vsyncpa [#allocation7], 1
    %1005 = vsyncpa [#allocation9], 1
  %1006 = vsyncmov [#allocation4]
  %s1007 = vpop.sfrf %1006
  %p1008 = scmp.eq.s32.totalorder %s1007, 0
  %p1009 = pneg %p1008
  %1011 = shalt.err (%p1009)
  %s1012 = scalar_lea.sflag [#allocation4], 1
  %1013 = vsyncmov %s1012
  %s1014 = vpop.sfrf %1013
  %p1015 = scmp.eq.s32.totalorder %s1014, 0
  %p1016 = pneg %p1015
  %1018 = shalt.err (%p1016)
  %s1019 = scalar_lea.sflag [#allocation4], 2
  %1020 = vsyncmov %s1019
  %s1021 = vpop.sfrf %1020
  %p1022 = scmp.eq.s32.totalorder %s1021, 0
  %p1023 = pneg %p1022
  %1025 = shalt.err (%p1023)
  %s1026 = scalar_lea.sflag [#allocation4], 3
  %1027 = vsyncmov %s1026
  %s1028 = vpop.sfrf %1027
  %p1029 = scmp.eq.s32.totalorder %s1028, 0
  %p1030 = pneg %p1029
  %1032 = shalt.err (%p1030)
  %s1033 = scalar_lea.sflag [#allocation4], 4
  %1034 = vsyncmov %s1033
  %s1035 = vpop.sfrf %1034
  %p1036 = scmp.eq.s32.totalorder %s1035, 0
  %p1037 = pneg %p1036
  %1039 = shalt.err (%p1037)
  %s1040 = scalar_lea.sflag [#allocation4], 5
  %1041 = vsyncmov %s1040
  %s1042 = vpop.sfrf %1041
  %p1043 = scmp.eq.s32.totalorder %s1042, 0
  %p1044 = pneg %p1043
  %1046 = shalt.err (%p1044)
  %s1047 = scalar_lea.sflag [#allocation4], 6
  %1048 = vsyncmov %s1047
  %s1049 = vpop.sfrf %1048
  %p1050 = scmp.eq.s32.totalorder %s1049, 0
  %p1051 = pneg %p1050
  %1053 = shalt.err (%p1051)
  %s1054 = scalar_lea.sflag [#allocation4], 7
  %1055 = vsyncmov %s1054
  %s1056 = vpop.sfrf %1055
  %p1057 = scmp.eq.s32.totalorder %s1056, 0
  %p1058 = pneg %p1057
  %1060 = shalt.err (%p1058)
  %s1061 = scalar_lea.sflag [#allocation4], 8
  %1062 = vsyncmov %s1061
  %s1063 = vpop.sfrf %1062
  %p1064 = scmp.eq.s32.totalorder %s1063, 0
  %p1065 = pneg %p1064
  %1067 = shalt.err (%p1065)
  %s1068 = scalar_lea.sflag [#allocation4], 9
  %1069 = vsyncmov %s1068
  %s1070 = vpop.sfrf %1069
  %p1071 = scmp.eq.s32.totalorder %s1070, 0
  %p1072 = pneg %p1071
  %1074 = shalt.err (%p1072)
  %s1075 = scalar_lea.sflag [#allocation4], 10
  %1076 = vsyncmov %s1075
  %s1077 = vpop.sfrf %1076
  %p1078 = scmp.eq.s32.totalorder %s1077, 0
  %p1079 = pneg %p1078
  %1081 = shalt.err (%p1079)
  %s1082 = scalar_lea.sflag [#allocation4], 11
  %1083 = vsyncmov %s1082
  %s1084 = vpop.sfrf %1083
  %p1085 = scmp.eq.s32.totalorder %s1084, 0
  %p1086 = pneg %p1085
  %1088 = shalt.err (%p1086)
  %s1089 = scalar_lea.sflag [#allocation4], 12
  %1090 = vsyncmov %s1089
  %s1091 = vpop.sfrf %1090
  %p1092 = scmp.eq.s32.totalorder %s1091, 0
  %p1093 = pneg %p1092
  %1095 = shalt.err (%p1093)
  %s1096 = scalar_lea.sflag [#allocation4], 13
  %1097 = vsyncmov %s1096
  %s1098 = vpop.sfrf %1097
  %p1099 = scmp.eq.s32.totalorder %s1098, 0
  %p1100 = pneg %p1099
  %1102 = shalt.err (%p1100)
  %s1103 = scalar_lea.sflag [#allocation4], 14
  %1104 = vsyncmov %s1103
  %s1105 = vpop.sfrf %1104
  %p1106 = scmp.eq.s32.totalorder %s1105, 0
  %p1107 = pneg %p1106
  %1109 = shalt.err (%p1107)
  %s1110 = scalar_lea.sflag [#allocation4], 15
  %1111 = vsyncmov %s1110
  %s1112 = vpop.sfrf %1111
  %p1113 = scmp.eq.s32.totalorder %s1112, 0
  %p1114 = pneg %p1113
  %1116 = shalt.err (%p1114)

</llo_original>
